<compile_context>
chip_gen: v5e
topology: v5e:2x2
jax: 0.10.0
libtpu: 0.0.40
codegen_flags: <defaults>
</compile_context>

<pallas_src>
import functools

import jax
import jax.numpy as jnp
from jax import lax
from jax.experimental import pallas as pl
from jax.experimental.pallas import tpu as pltpu


def _upsample_conv_kernel(top_ref, mid_ref, bot_ref, w_ref, o_ref, *, transpose_out):
    """3x3 'same' conv (bias-free) for one row-tile of one batch element.

    top_ref: (1, 1,  W, C)  row above the tile (clamped; zeroed when t == 0)
    mid_ref: (1, TH, W, C)  the tile's rows
    bot_ref: (1, 1,  W, C)  row below the tile (clamped; zeroed when t == last)
    w_ref:   (OC, 9C) if transpose_out else (9C, OC)   im2col weight
    o_ref:   (1, OC, TH*W)  if transpose_out else (1, TH*W, OC)
    """
    t = pl.program_id(1)
    nt = pl.num_programs(1)
    _, TH, W, C = mid_ref.shape
    dt = mid_ref.dtype

    # Conv zero-padding (rows) folded into the kernel: halo rows at the image
    # boundary are replaced by zeros.
    top = jnp.where(t == 0, jnp.zeros((1, W, C), dt), top_ref[0])
    bot = jnp.where(t == nt - 1, jnp.zeros((1, W, C), dt), bot_ref[0])
    slab = jnp.concatenate([top, mid_ref[0], bot], axis=0)          # (TH+2, W, C)

    # Conv zero-padding (columns) folded in: two width-shifted slab copies.
    zcol = jnp.zeros((TH + 2, 1, C), dt)
    slab_l = jnp.concatenate([zcol, slab[:, :W - 1, :]], axis=1)    # x[.., w-1, ..]
    slab_r = jnp.concatenate([slab[:, 1:, :], zcol], axis=1)        # x[.., w+1, ..]
    shifted = (slab_l, slab, slab_r)                                # kw = 0, 1, 2

    # im2col: every tap is a free leading-dim slice of one of the 3 shifted
    # slabs (2 sublane-shifted copies total instead of 6 per-tap slices).
    taps = [shifted[kw][kh:kh + TH] for kh in range(3) for kw in range(3)]
    # (TH, W, 9C) -> (TH*W, 9C): lane (channel) dim untouched; layout-free when
    # W % 8 == 0 (f32) / W % 16 == 0 (bf16).
    patches = jnp.concatenate(taps, axis=-1).reshape(TH * W, 9 * C)

    if transpose_out:
        # (OC, 9C) x (TH*W, 9C)^T -> (OC, TH*W).  A @ B^T form (same as q @ k^T
        # in attention) so no materialized transpose; stores become lane-dense
        # even when OC < 128.
        acc = lax.dot_general(w_ref[...], patches,
                              (((1,), (1,)), ((), ())),
                              preferred_element_type=jnp.float32)
    else:
        # (TH*W, 9C) x (9C, OC) -> (TH*W, OC); OC >= 128 is already lane-dense.
        acc = jnp.dot(patches, w_ref[...], preferred_element_type=jnp.float32)

    o_ref[0] = acc.astype(o_ref.dtype)


def _pick_row_tile(H, W, C, OC, itemsize, budget_bytes):
    """Largest row tile TH (divisor of H) whose per-step working set fits the
    VMEM budget, with M = TH*W kept in the ~1K-8K range when possible."""

    def est(th):
        in_main = th * W * C * itemsize
        halo = 2 * W * C * itemsize
        out_blk = th * W * OC * itemsize
        w_bytes = OC * 9 * C * itemsize
        slabs = 3 * (th + 2) * W * C * itemsize      # slab + 2 shifted copies
        patches = th * W * 9 * C * itemsize
        acc = th * W * OC * 4                        # f32 accumulator
        # double-buffered pipeline blocks + single-buffered in-kernel temps
        return 2 * (in_main + 2 * halo + out_blk + w_bytes) + slabs + patches + acc

    divisors = [d for d in range(1, H + 1) if H % d == 0]
    # Tiled output blocks need a lane-dim (or sublane-dim) multiple of 128
    # unless the tile covers the whole image.
    ok = [d for d in divisors
          if est(d) <= budget_bytes and (d == H or (d * W) % 128 == 0)]
    if not ok:
        # Fall back to one tile per image (tiny images); compile may still
        # request more scoped VMEM than the soft budget.
        return H
    preferred = [d for d in ok if d * W <= 8192]
    # TODO(synk): ragged last tile (pl.BoundedSlice / masking) for H with poor
    # divisors, and an extra W-tile grid axis when B * (H // TH) < 4 on v7x.
    return max(preferred) if preferred else min(ok)


def upsample_forward(x_nchw, weight_oihw):
    """UpSample.forward: Conv2d(C, 2C, 3, padding=1, bias=False) + PixelShuffle(2).

    x_nchw:      (B, C, H, W)
    weight_oihw: (2C, C, 3, 3)   (PyTorch Conv2d weight layout)
    returns:     (B, C // 2, 2H, 2W) in NCHW, matching PyTorch semantics.
    """
    B, C, H, W = x_nchw.shape
    OC = weight_oihw.shape[0]
    assert OC % 4 == 0, "PixelShuffle(2) needs out_channels % 4 == 0"
    C_out = OC // 4
    dtype = x_nchw.dtype
    itemsize = jnp.dtype(dtype).itemsize

    # Per-generation VMEM sizing (v7x: 64 MiB, v5e/v6e: 128 MiB per core).
    try:
        vmem_cap = pltpu.get_tpu_info().vmem_capacity_bytes
    except Exception:
        vmem_cap = 64 * 1024 * 1024
    vmem_limit = int(max(min(0.85 * vmem_cap, 100 * 2 ** 20), 32 * 2 ** 20))
    budget = vmem_limit // 2

    TH = _pick_row_tile(H, W, C, OC, itemsize, budget)
    n_t = H // TH

    # NCHW -> NHWC (one XLA pass over the smallest tensor; padding is now done
    # inside the kernel, so there is no wrapper jnp.pad pass anymore).
    # TODO(synk): read NCHW blocks and transpose per-tile in VMEM to drop this.
    x_nhwc = jnp.transpose(x_nchw, (0, 2, 3, 1))

    transpose_out = OC < 128   # lane-dense stores for small 2C

    if transpose_out:
        # w_t[oc, (kh*3 + kw)*C + c] = weight[oc, c, kh, kw]
        w_mat = jnp.transpose(weight_oihw, (0, 2, 3, 1)).reshape(OC, 9 * C)
        w_spec = pl.BlockSpec((OC, 9 * C), lambda b, t: (0, 0))
        out_shape = jax.ShapeDtypeStruct((B, OC, H * W), dtype)
        out_spec = pl.BlockSpec((1, OC, TH * W), lambda b, t: (b, 0, t))
    else:
        # w2[(kh*3 + kw)*C + c, oc] = weight[oc, c, kh, kw]
        w_mat = jnp.transpose(weight_oihw, (2, 3, 1, 0)).reshape(9 * C, OC)
        w_spec = pl.BlockSpec((9 * C, OC), lambda b, t: (0, 0))
        out_shape = jax.ShapeDtypeStruct((B, H * W, OC), dtype)
        out_spec = pl.BlockSpec((1, TH * W, OC), lambda b, t: (b, t, 0))
    # Keep bf16 activations on the bf16 MXU path (don't silently promote).
    w_mat = w_mat.astype(dtype)

    kernel = functools.partial(_upsample_conv_kernel, transpose_out=transpose_out)

    conv = pl.pallas_call(
        kernel,
        out_shape=out_shape,
        grid_spec=pltpu.PrefetchScalarGridSpec(
            num_scalar_prefetch=0,
            grid=(B, n_t),
            in_specs=[
                # 1-row top halo: row t*TH - 1, clamped (zeroed in-kernel at t=0).
                pl.BlockSpec((1, 1, W, C),
                             lambda b, t: (b, jnp.maximum(t * TH - 1, 0), 0, 0)),
                # TH-row main block.
                pl.BlockSpec((1, TH, W, C), lambda b, t: (b, t, 0, 0)),
                # 1-row bottom halo: row t*TH + TH, clamped (zeroed at t=last).
                pl.BlockSpec((1, 1, W, C),
                             lambda b, t: (b, jnp.minimum(t * TH + TH, H - 1), 0, 0)),
                # im2col weight, resident in VMEM.
                w_spec,
            ],
            out_specs=out_spec,
        ),
        compiler_params=pltpu.CompilerParams(
            dimension_semantics=("parallel", "parallel"),
            vmem_limit_bytes=vmem_limit,
        ),
    )(x_nhwc, x_nhwc, x_nhwc, w_mat)

    # PixelShuffle(2): out[b, c, 2h+i, 2w+j] = conv[b, 4c + 2i + j, h, w].
    # TODO(synk): fuse this interleave into the kernel's store to drop the
    # remaining HBM round trip over the (largest) conv slab.
    r = 2
    if transpose_out:
        y = conv.reshape(B, C_out, r, r, H, W)
        y = jnp.transpose(y, (0, 1, 4, 2, 5, 3))          # (B, C_out, H, r, W, r)
    else:
        y = conv.reshape(B, H, W, C_out, r, r)
        y = jnp.transpose(y, (0, 3, 1, 4, 2, 5))          # (B, C_out, H, r, W, r)
    return y.reshape(B, C_out, H * r, W * r)


def _reference_forward(x_nchw, weight_oihw):
    """Pure-JAX reference mirroring torch Conv2d(padding=1) + PixelShuffle(2)."""
    B = x_nchw.shape[0]
    OC = weight_oihw.shape[0]
    conv = lax.conv_general_dilated(
        x_nchw, weight_oihw,
        window_strides=(1, 1), padding=((1, 1), (1, 1)),
        dimension_numbers=('NCHW', 'OIHW', 'NCHW'))
    r = 2
    C_out = OC // (r * r)
    _, _, H, W = conv.shape
    y = conv.reshape(B, C_out, r, r, H, W)
    y = jnp.transpose(y, (0, 1, 4, 2, 5, 3))
    return y.reshape(B, C_out, H * r, W * r)


if __name__ == "__main__":
    # Small shapes consistent with the module: B=2, channels=4, spatial=16.
    B, C, H, W = 2, 4, 16, 16
    keys = jax.random.split(jax.random.PRNGKey(0), 4)

    x = jax.random.normal(keys[0], (B, C, H, W), dtype=jnp.float32)
    weight = jax.random.normal(keys[1], (2 * C, C, 3, 3), dtype=jnp.float32) * 0.1

    out = jax.block_until_ready(upsample_forward(x, weight))
    assert out.shape == (B, C // 2, 2 * H, 2 * W), out.shape
    ref = jax.block_until_ready(_reference_forward(x, weight))
    assert jnp.allclose(out, ref, rtol=2e-5, atol=2e-5), \
        float(jnp.max(jnp.abs(out - ref)))

    # Also exercise the lane-dense OC >= 128 path (channels = 64 -> OC = 128).
    C2 = 64
    x2 = jax.random.normal(keys[2], (1, C2, H, W), dtype=jnp.float32)
    w2 = jax.random.normal(keys[3], (2 * C2, C2, 3, 3), dtype=jnp.float32) * 0.05
    out2 = jax.block_until_ready(upsample_forward(x2, w2))
    ref2 = jax.block_until_ready(_reference_forward(x2, w2))
    assert out2.shape == (1, C2 // 2, 2 * H, 2 * W), out2.shape
    assert jnp.allclose(out2, ref2, rtol=2e-5, atol=2e-5), \
        float(jnp.max(jnp.abs(out2 - ref2)))

    print("KERNEL_OK")
</pallas_src>

<mosaic_0001>
module attributes {stable_mosaic.version = 11 : i64} {
  func.func @_upsample_conv_kernel(%arg0: i32, %arg1: i32, %arg2: memref<1x1x16x4xf32, #tpu.memory_space<vmem>>, %arg3: memref<1x16x16x4xf32, #tpu.memory_space<vmem>>, %arg4: memref<1x1x16x4xf32, #tpu.memory_space<vmem>>, %arg5: memref<8x36xf32, #tpu.memory_space<vmem>>, %arg6: memref<1x8x256xf32, #tpu.memory_space<vmem>>) attributes {dimension_semantics = [#tpu.dimension_semantics<parallel>, #tpu.dimension_semantics<parallel>], iteration_bounds = array<i64: 2, 1>, scalar_prefetch = 0 : i64, scratch_operands = 0 : i64, tpu.core_type = #tpu.core_type<tc>, window_params = [{transform_indices = @transform_0, window_bounds = array<i64: 1, 1, 16, 4>}, {transform_indices = @transform_1, window_bounds = array<i64: 1, 16, 16, 4>}, {transform_indices = @transform_2, window_bounds = array<i64: 1, 1, 16, 4>}, {pipeline_mode = #tpu.pipeline_mode<synchronous>, transform_indices = @transform_3, window_bounds = array<i64: 8, 36>}, {transform_indices = @transform_4, window_bounds = array<i64: 1, 8, 256>}]} {
    %c0_i32 = arith.constant 0 : i32
    %0 = arith.cmpi eq, %arg1, %c0_i32 : i32
    %cst = arith.constant 0.000000e+00 : f32
    %1 = vector.broadcast %cst : f32 to vector<1x16x4xf32>
    %c0 = arith.constant 0 : index
    %c0_0 = arith.constant 0 : index
    %c0_1 = arith.constant 0 : index
    %c0_2 = arith.constant 0 : index
    %2 = vector.load %arg2[%c0, %c0_0, %c0_1, %c0_2] : memref<1x1x16x4xf32, #tpu.memory_space<vmem>>, vector<1x1x16x4xf32>
    %3 = vector.shape_cast %2 : vector<1x1x16x4xf32> to vector<1x16x4xf32>
    %4 = arith.select %0, %1, %3 : vector<1x16x4xf32>
    %c0_i32_3 = arith.constant 0 : i32
    %5 = arith.cmpi eq, %arg1, %c0_i32_3 : i32
    %cst_4 = arith.constant 0.000000e+00 : f32
    %6 = vector.broadcast %cst_4 : f32 to vector<1x16x4xf32>
    %c0_5 = arith.constant 0 : index
    %c0_6 = arith.constant 0 : index
    %c0_7 = arith.constant 0 : index
    %c0_8 = arith.constant 0 : index
    %7 = vector.load %arg4[%c0_5, %c0_6, %c0_7, %c0_8] : memref<1x1x16x4xf32, #tpu.memory_space<vmem>>, vector<1x1x16x4xf32>
    %8 = vector.shape_cast %7 : vector<1x1x16x4xf32> to vector<1x16x4xf32>
    %9 = arith.select %5, %6, %8 : vector<1x16x4xf32>
    %c0_9 = arith.constant 0 : index
    %c0_10 = arith.constant 0 : index
    %c0_11 = arith.constant 0 : index
    %c0_12 = arith.constant 0 : index
    %10 = vector.load %arg3[%c0_9, %c0_10, %c0_11, %c0_12] : memref<1x16x16x4xf32, #tpu.memory_space<vmem>>, vector<1x16x16x4xf32>
    %11 = vector.shape_cast %10 : vector<1x16x16x4xf32> to vector<16x16x4xf32>
    %12 = tpu.concatenate %4, %11, %9 in 0 : vector<1x16x4xf32>, vector<16x16x4xf32>, vector<1x16x4xf32> -> vector<18x16x4xf32>
    %cst_13 = arith.constant 0.000000e+00 : f32
    %13 = vector.broadcast %cst_13 : f32 to vector<18x1x4xf32>
    %14 = vector.extract_strided_slice %12 {offsets = [0, 0, 0], sizes = [18, 15, 4], strides = [1, 1, 1]} : vector<18x16x4xf32> to vector<18x15x4xf32>
    %15 = tpu.concatenate %13, %14 in 1 : vector<18x1x4xf32>, vector<18x15x4xf32> -> vector<18x16x4xf32>
    %16 = vector.extract_strided_slice %12 {offsets = [0, 1, 0], sizes = [18, 15, 4], strides = [1, 1, 1]} : vector<18x16x4xf32> to vector<18x15x4xf32>
    %17 = tpu.concatenate %16, %13 in 1 : vector<18x15x4xf32>, vector<18x1x4xf32> -> vector<18x16x4xf32>
    %18 = vector.extract_strided_slice %15 {offsets = [0, 0, 0], sizes = [16, 16, 4], strides = [1, 1, 1]} : vector<18x16x4xf32> to vector<16x16x4xf32>
    %19 = vector.extract_strided_slice %12 {offsets = [0, 0, 0], sizes = [16, 16, 4], strides = [1, 1, 1]} : vector<18x16x4xf32> to vector<16x16x4xf32>
    %20 = vector.extract_strided_slice %17 {offsets = [0, 0, 0], sizes = [16, 16, 4], strides = [1, 1, 1]} : vector<18x16x4xf32> to vector<16x16x4xf32>
    %21 = vector.extract_strided_slice %15 {offsets = [1, 0, 0], sizes = [16, 16, 4], strides = [1, 1, 1]} : vector<18x16x4xf32> to vector<16x16x4xf32>
    %22 = vector.extract_strided_slice %12 {offsets = [1, 0, 0], sizes = [16, 16, 4], strides = [1, 1, 1]} : vector<18x16x4xf32> to vector<16x16x4xf32>
    %23 = vector.extract_strided_slice %17 {offsets = [1, 0, 0], sizes = [16, 16, 4], strides = [1, 1, 1]} : vector<18x16x4xf32> to vector<16x16x4xf32>
    %24 = vector.extract_strided_slice %15 {offsets = [2, 0, 0], sizes = [16, 16, 4], strides = [1, 1, 1]} : vector<18x16x4xf32> to vector<16x16x4xf32>
    %25 = vector.extract_strided_slice %12 {offsets = [2, 0, 0], sizes = [16, 16, 4], strides = [1, 1, 1]} : vector<18x16x4xf32> to vector<16x16x4xf32>
    %26 = vector.extract_strided_slice %17 {offsets = [2, 0, 0], sizes = [16, 16, 4], strides = [1, 1, 1]} : vector<18x16x4xf32> to vector<16x16x4xf32>
    %27 = tpu.concatenate %18, %19, %20, %21, %22, %23, %24, %25, %26 in 2 : vector<16x16x4xf32>, vector<16x16x4xf32>, vector<16x16x4xf32>, vector<16x16x4xf32>, vector<16x16x4xf32>, vector<16x16x4xf32>, vector<16x16x4xf32>, vector<16x16x4xf32>, vector<16x16x4xf32> -> vector<16x16x36xf32>
    %28 = vector.shape_cast %27 : vector<16x16x36xf32> to vector<256x36xf32>
    %c0_14 = arith.constant 0 : index
    %c0_15 = arith.constant 0 : index
    %29 = vector.load %arg5[%c0_14, %c0_15] : memref<8x36xf32, #tpu.memory_space<vmem>>, vector<8x36xf32>
    %cst_16 = arith.constant dense<0.000000e+00> : vector<8x256xf32>
    %30 = tpu.matmul %29, %28, %cst_16 {dimension_numbers = #tpu.dot_dimension_numbers<[1], [1], [0], [0], [0, 0, 1, 0], [], []>} : vector<8x36xf32>, vector<256x36xf32>, vector<8x256xf32> -> vector<8x256xf32>
    %c0_17 = arith.constant 0 : index
    %c0_18 = arith.constant 0 : index
    %c0_19 = arith.constant 0 : index
    %31 = vector.load %arg6[%c0_17, %c0_18, %c0_19] : memref<1x8x256xf32, #tpu.memory_space<vmem>>, vector<1x8x256xf32>
    %32 = vector.shape_cast %31 : vector<1x8x256xf32> to vector<8x256xf32>
    %33 = vector.shape_cast %30 : vector<8x256xf32> to vector<1x8x256xf32>
    tpu.vector_store %arg6[%c0_17, %c0_18, %c0_19], %33 {strides = array<i32>} : memref<1x8x256xf32, #tpu.memory_space<vmem>>, vector<1x8x256xf32>,
    return
  }
  func.func @transform_0(%arg0: i32, %arg1: i32) -> (i32, i32, i32, i32) {
    %c16_i32 = arith.constant 16 : i32
    %0 = arith.muli %arg1, %c16_i32 : i32
    %c1_i32 = arith.constant 1 : i32
    %1 = arith.subi %0, %c1_i32 : i32
    %c0_i32 = arith.constant 0 : i32
    %2 = arith.maxsi %1, %c0_i32 : i32
    %c0_i32_0 = arith.constant 0 : i32
    %c0_i32_1 = arith.constant 0 : i32
    %c0_i32_2 = arith.constant 0 : i32
    return %arg0, %2, %c0_i32_0, %c0_i32_1 : i32, i32, i32, i32
  }
  func.func @transform_1(%arg0: i32, %arg1: i32) -> (i32, i32, i32, i32) {
    %c0_i32 = arith.constant 0 : i32
    %c0_i32_0 = arith.constant 0 : i32
    %c0_i32_1 = arith.constant 0 : i32
    return %arg0, %arg1, %c0_i32, %c0_i32_0 : i32, i32, i32, i32
  }
  func.func @transform_2(%arg0: i32, %arg1: i32) -> (i32, i32, i32, i32) {
    %c16_i32 = arith.constant 16 : i32
    %0 = arith.muli %arg1, %c16_i32 : i32
    %c16_i32_0 = arith.constant 16 : i32
    %1 = arith.addi %0, %c16_i32_0 : i32
    %c15_i32 = arith.constant 15 : i32
    %2 = arith.minsi %1, %c15_i32 : i32
    %c0_i32 = arith.constant 0 : i32
    %c0_i32_1 = arith.constant 0 : i32
    %c0_i32_2 = arith.constant 0 : i32
    return %arg0, %2, %c0_i32, %c0_i32_1 : i32, i32, i32, i32
  }
  func.func @transform_3(%arg0: i32, %arg1: i32) -> (i32, i32) {
    %c0_i32 = arith.constant 0 : i32
    %c0_i32_0 = arith.constant 0 : i32
    %c0_i32_1 = arith.constant 0 : i32
    return %c0_i32, %c0_i32_0 : i32, i32
  }
  func.func @transform_4(%arg0: i32, %arg1: i32) -> (i32, i32, i32) {
    %c0_i32 = arith.constant 0 : i32
    %c0_i32_0 = arith.constant 0 : i32
    return %arg0, %c0_i32, %arg1 : i32, i32, i32
  }
}

</mosaic_0001>

<llo_original>
// kernel: tpu_custom_call.1
$region0: #{tpu_custom_call.1}
  #allocation0 [shape = 'u32[]', space=smem, size = 0x4, offset = 0x4, fixed_abs, tag = 'smem constant byte address 0x4 - core index']
  #allocation1 [shape = 'u32[72,128]{1,0:T(1,128)}', space=vmem, size = 0x9000, scoped, tag = 'internal scratch']
  %s0 = inlined_call_operand.vmem [shape: f32[2,16,16,4], index: 0, kind: input, shape index: {}]
  %s1 = inlined_call_operand.vmem [shape: f32[2,16,16,4], index: 1, kind: input, shape index: {}]
  %s2 = inlined_call_operand.vmem [shape: f32[2,16,16,4], index: 2, kind: input, shape index: {}]
  %s3 = inlined_call_operand.vmem [shape: f32[8,36], index: 3, kind: input, shape index: {}]
  %s4 = inlined_call_operand.hbm [shape: f32[2,8,256], index: 4, kind: output, shape index: {}]
  %s5 = sld [smem:[#allocation0]]
  $region49: #{tpu_custom_call.1} parent=0
    _
  %s7 = ssub.s32 1, %s5
  %s8 = scalar_select 0, %s7, %s5
  $region1: #{tpu_custom_call.1} parent=0
    #allocation2 [shape = 'u8[16384]{0}', space=vmem, size = 0x4000, scoped, tag = 'output window, operand 0']
    #allocation3 [shape = 's32[2]{0}', space=sflag, size = 0x8, scoped, tag = 'scoped memory for tpu_custom_call.1']
    %9 = vsyncpa [#allocation3], 0
    %s10 = scalar_lea.sflag [#allocation3], 1
    %11 = vsyncpa %s10, 0
    loop: start=0, step=1, limit=4
    $region2: #{tpu_custom_call.1} parent=1 // loop_pre_header
      _
    $region3: #{tpu_custom_call.1} parent=1 // loop_header
      %s13 = sphi 0, %s17
      %p14 = scmp.ge.s32.totalorder %s13, 4
      %s20 = sphi 0, %s32
      %s21 = sphi 0, %s28
      %s22 = sphi 0, %s20
      %s23 = sphi 0, %s21
      %s24 = sphi 0, %s22
      %s25 = sphi 0, %s23
      %s45 = sphi 0, %s47
      %s48 = sphi 0, %s45
      %s49 = sphi 0, %s48
      %s65 = sphi 0, %s49
      %s73 = sphi 0, %s75
      %s76 = sphi 0, %s73
      %s77 = sphi 0, %s76
      %s93 = sphi 0, %s77
      %s109 = sphi 0, %s111
      %s112 = sphi 0, %s109
      %s113 = sphi 0, %s112
      %s129 = sphi 0, %s113
      %s133 = sphi 0, %s133
      %s135 = sphi 0, %s133
      %s136 = sphi 0, %s135
      %s150 = sphi 0, %s136
      %s158 = sphi 0, %s160
      %s161 = sphi 0, %s158
      %s162 = sphi 0, %s161
      %s178 = sphi 0, %s162
    $region4: #{tpu_custom_call.1} parent=1 // loop_header_branch
      %16 = sbr.rel (%p14) target = $region8
    $region5: #{tpu_custom_call.1} parent=1 // loop_body
      %s18 = ssub.s32 %s13, 1
      %s19 = ssub.s32 %s13, 2
      %s26 = sadd.s32 1, %s21
      %p27 = scmp.ge.s32.totalorder %s26, 1
      %s28 = scalar_select %p27, 0, %s26
      %s29 = sadd.s32 1, %s20
      %s30 = scalar_select %p27, %s29, %s20
      %p31 = scmp.ge.s32.totalorder %s30, 2
      %s32 = scalar_select %p31, 0, %s30
      %s33 = smul.u32 %s21, 16
      %s34 = ssub.s32 %s33, 1
      %p35 = scmp.gt.s32.totalorder %s34, 0
      %s36 = scalar_select %p35, %s34, 0
      %s37 = smul.u32 %s28, 16
      %s38 = ssub.s32 %s37, 1
      %p39 = scmp.gt.s32.totalorder %s38, 0
      %s40 = scalar_select %p39, %s38, 0
      %s41 = ssub.s32 %s20, %s32
      %s42 = ssub.s32 %s36, %s40
      %s43 = sor.u32 %s41, %s42
      %p44 = scmp.eq.s32.totalorder %s43, 0
      %s46 = sadd.s32 %s45, 1
      %s47 = scalar_select %p44, %s45, %s46
      %p50 = pneg %p44
      %p51 = scmp.eq.s32.totalorder %s13, 1
      %p52 = por %p50, %p51
      %p53 = scmp.ne.s32.totalorder %s45, %s48
      %p54 = scmp.eq.s32.totalorder %s13, 0
      %p55 = por %p53, %p54
      %p56 = scmp.ne.s32.totalorder %s45, %s48
      %p57 = scmp.eq.s32.totalorder %s18, 1
      %p58 = por %p56, %p57
      %p59 = scmp.ne.s32.totalorder %s48, %s49
      %p60 = scmp.eq.s32.totalorder %s18, 0
      %p61 = por %p59, %p60
      %p62 = scmp.ne.s32.totalorder %s48, %s49
      %p63 = scmp.eq.s32.totalorder %s19, 1
      %p64 = por %p62, %p63
      %p66 = scmp.ne.s32.totalorder %s49, %s65
      %p67 = scmp.eq.s32.totalorder %s19, 0
      %p68 = por %p66, %p67
      %s69 = ssub.s32 %s20, %s32
      %s70 = ssub.s32 %s21, %s28
      %s71 = sor.u32 %s69, %s70
      %p72 = scmp.eq.s32.totalorder %s71, 0
      %s74 = sadd.s32 %s73, 1
      %s75 = scalar_select %p72, %s73, %s74
      %p78 = pneg %p72
      %p79 = scmp.eq.s32.totalorder %s13, 1
      %p80 = por %p78, %p79
      %p81 = scmp.ne.s32.totalorder %s73, %s76
      %p82 = scmp.eq.s32.totalorder %s13, 0
      %p83 = por %p81, %p82
      %p84 = scmp.ne.s32.totalorder %s73, %s76
      %p85 = scmp.eq.s32.totalorder %s18, 1
      %p86 = por %p84, %p85
      %p87 = scmp.ne.s32.totalorder %s76, %s77
      %p88 = scmp.eq.s32.totalorder %s18, 0
      %p89 = por %p87, %p88
      %p90 = scmp.ne.s32.totalorder %s76, %s77
      %p91 = scmp.eq.s32.totalorder %s19, 1
      %p92 = por %p90, %p91
      %p94 = scmp.ne.s32.totalorder %s77, %s93
      %p95 = scmp.eq.s32.totalorder %s19, 0
      %p96 = por %p94, %p95
      %s97 = smul.u32 %s21, 16
      %s98 = sadd.s32 %s97, 16
      %p99 = scmp.lt.s32.totalorder %s98, 15
      %s100 = scalar_select %p99, %s98, 15
      %s101 = smul.u32 %s28, 16
      %s102 = sadd.s32 %s101, 16
      %p103 = scmp.lt.s32.totalorder %s102, 15
      %s104 = scalar_select %p103, %s102, 15
      %s105 = ssub.s32 %s20, %s32
      %s106 = ssub.s32 %s100, %s104
      %s107 = sor.u32 %s105, %s106
      %p108 = scmp.eq.s32.totalorder %s107, 0
      %s110 = sadd.s32 %s109, 1
      %s111 = scalar_select %p108, %s109, %s110
      %p114 = pneg %p108
      %p115 = scmp.eq.s32.totalorder %s13, 1
      %p116 = por %p114, %p115
      %p117 = scmp.ne.s32.totalorder %s109, %s112
      %p118 = scmp.eq.s32.totalorder %s13, 0
      %p119 = por %p117, %p118
      %p120 = scmp.ne.s32.totalorder %s109, %s112
      %p121 = scmp.eq.s32.totalorder %s18, 1
      %p122 = por %p120, %p121
      %p123 = scmp.ne.s32.totalorder %s112, %s113
      %p124 = scmp.eq.s32.totalorder %s18, 0
      %p125 = por %p123, %p124
      %p126 = scmp.ne.s32.totalorder %s112, %s113
      %p127 = scmp.eq.s32.totalorder %s19, 1
      %p128 = por %p126, %p127
      %p130 = scmp.ne.s32.totalorder %s113, %s129
      %p131 = scmp.eq.s32.totalorder %s19, 0
      %p132 = por %p130, %p131
      %s134 = sadd.s32 %s133, 1
      %p137 = scmp.eq.s32.totalorder %s13, 1
      %p138 = scmp.ne.s32.totalorder %s133, %s135
      %p139 = scmp.eq.s32.totalorder %s13, 0
      %p140 = por %p138, %p139
      %p141 = scmp.ne.s32.totalorder %s133, %s135
      %p142 = scmp.eq.s32.totalorder %s18, 1
      %p143 = por %p141, %p142
      %p144 = scmp.ne.s32.totalorder %s135, %s136
      %p145 = scmp.eq.s32.totalorder %s18, 0
      %p146 = por %p144, %p145
      %p147 = scmp.ne.s32.totalorder %s135, %s136
      %p148 = scmp.eq.s32.totalorder %s19, 1
      %p149 = por %p147, %p148
      %p151 = scmp.ne.s32.totalorder %s136, %s150
      %p152 = scmp.eq.s32.totalorder %s19, 0
      %p153 = por %p151, %p152
      %s154 = ssub.s32 %s20, %s32
      %s155 = ssub.s32 %s21, %s28
      %s156 = sor.u32 %s154, %s155
      %p157 = scmp.eq.s32.totalorder %s156, 0
      %s159 = sadd.s32 %s158, 1
      %s160 = scalar_select %p157, %s158, %s159
      %p163 = pneg %p157
      %p164 = scmp.eq.s32.totalorder %s13, 1
      %p165 = por %p163, %p164
      %p166 = scmp.ne.s32.totalorder %s158, %s161
      %p167 = scmp.eq.s32.totalorder %s13, 0
      %p168 = por %p166, %p167
      %p169 = scmp.ne.s32.totalorder %s158, %s161
      %p170 = scmp.eq.s32.totalorder %s18, 1
      %p171 = por %p169, %p170
      %p172 = scmp.ne.s32.totalorder %s161, %s162
      %p173 = scmp.eq.s32.totalorder %s18, 0
      %p174 = por %p172, %p173
      %p175 = scmp.ne.s32.totalorder %s161, %s162
      %p176 = scmp.eq.s32.totalorder %s19, 1
      %p177 = por %p175, %p176
      %p179 = scmp.ne.s32.totalorder %s162, %s178
      %p180 = scmp.eq.s32.totalorder %s19, 0
      %p181 = por %p179, %p180
      %p182 = scmp.le.s32.totalorder 1, %s13
      %p183 = scmp.lt.s32.totalorder %s13, 3
      %p184 = pnand %p182, %p183
      %p185 = pneg %p184
      // Predicated region
      $region9: #{tpu_custom_call.1} parent=5 // pred_check
        _
      $region10: #{tpu_custom_call.1} parent=5 // pred_check_branch
        %187 = sbr.rel (%p184) target = $region12
      $region11: #{tpu_custom_call.1} parent=5 // pred_region
        %s188 = ssub.s32 %s13, 1
        // Predicated region
        $region13: #{tpu_custom_call.1} parent=11 // pred_check
          %p189 = pneg %p146
        $region14: #{tpu_custom_call.1} parent=11 // pred_check_branch
          %191 = sbr.rel (%p189) target = $region16
        $region15: #{tpu_custom_call.1} parent=11 // pred_region
          _
        $region16: #{tpu_custom_call.1} parent=11 // pred_fallthru
          _
      $region12: #{tpu_custom_call.1} parent=5 // pred_fallthru
        _
      %p192 = scmp.lt.s32.totalorder %s13, 2
      // Predicated region
      $region17: #{tpu_custom_call.1} parent=5 // pred_check
        %p193 = pneg %p192
      $region18: #{tpu_custom_call.1} parent=5 // pred_check_branch
        %195 = sbr.rel (%p193) target = $region20
      $region19: #{tpu_custom_call.1} parent=5 // pred_region
        // Predicated region
        $region21: #{tpu_custom_call.1} parent=19 // pred_check
          %p196 = pneg %p55
        $region22: #{tpu_custom_call.1} parent=19 // pred_check_branch
          %198 = sbr.rel (%p196) target = $region24
        $region23: #{tpu_custom_call.1} parent=19 // pred_region
          %s199 = smul.u32 %s21, 16
          %s200 = ssub.s32 %s199, 1
          %p201 = scmp.gt.s32.totalorder %s200, 0
          %s202 = scalar_select %p201, %s200, 0
          %p203 = scmp.lt.s32.totalorder %s20, 1
          %s204 = scalar_select %p203, %s20, 1
          %p205 = scmp.lt.s32.totalorder %s202, 15
          %s206 = scalar_select %p205, %s202, 15
          %s207 = smul.addr %s206, 2
          %s208 = smul.addr %s204, 32
          %s209 = sadd.s32 %s207, %s208
          %s210 = smul.addr %s209, 8
          %s211 = scalar_lea.vmem %s0, %s210
          %s212 = smul.u32 %s21, 16
          %s213 = ssub.s32 %s212, 1
          %p214 = scmp.gt.s32.totalorder %s213, 0
          %s215 = scalar_select %p214, %s213, 0
        $region24: #{tpu_custom_call.1} parent=19 // pred_fallthru
          _
        // Predicated region
        $region25: #{tpu_custom_call.1} parent=19 // pred_check
          %p216 = pneg %p83
        $region26: #{tpu_custom_call.1} parent=19 // pred_check_branch
          %218 = sbr.rel (%p216) target = $region28
        $region27: #{tpu_custom_call.1} parent=19 // pred_region
          %s219 = smul.u32 16, %s21
          %p220 = scmp.lt.s32.totalorder %s20, 1
          %s221 = scalar_select %p220, %s20, 1
          %p222 = scmp.lt.s32.totalorder %s219, 15
          %s223 = scalar_select %p222, %s219, 15
          %s224 = smul.addr %s223, 2
          %s225 = smul.addr %s221, 32
          %s226 = sadd.s32 %s224, %s225
          %s227 = smul.addr %s226, 8
          %s228 = scalar_lea.vmem %s1, %s227
          %s229 = smul.u32 16, %s21
        $region28: #{tpu_custom_call.1} parent=19 // pred_fallthru
          _
        // Predicated region
        $region29: #{tpu_custom_call.1} parent=19 // pred_check
          %p230 = pneg %p119
        $region30: #{tpu_custom_call.1} parent=19 // pred_check_branch
          %232 = sbr.rel (%p230) target = $region32
        $region31: #{tpu_custom_call.1} parent=19 // pred_region
          %s233 = smul.u32 %s21, 16
          %s234 = sadd.s32 %s233, 16
          %p235 = scmp.lt.s32.totalorder %s234, 15
          %s236 = scalar_select %p235, %s234, 15
          %p237 = scmp.lt.s32.totalorder %s20, 1
          %s238 = scalar_select %p237, %s20, 1
          %p239 = scmp.lt.s32.totalorder %s236, 15
          %s240 = scalar_select %p239, %s236, 15
          %s241 = smul.addr %s240, 2
          %s242 = smul.addr %s238, 32
          %s243 = sadd.s32 %s241, %s242
          %s244 = smul.addr %s243, 8
          %s245 = scalar_lea.vmem %s2, %s244
          %s246 = smul.u32 %s21, 16
          %s247 = sadd.s32 %s246, 16
          %p248 = scmp.lt.s32.totalorder %s247, 15
          %s249 = scalar_select %p248, %s247, 15
        $region32: #{tpu_custom_call.1} parent=19 // pred_fallthru
          _
      $region20: #{tpu_custom_call.1} parent=5 // pred_fallthru
        _
      %p250 = scmp.le.s32.totalorder 1, %s13
      %p251 = scmp.lt.s32.totalorder %s13, 3
      %p252 = pnand %p250, %p251
      %p253 = pneg %p252
      // Predicated region
      $region33: #{tpu_custom_call.1} parent=5 // pred_check
        _
      $region34: #{tpu_custom_call.1} parent=5 // pred_check_branch
        %255 = sbr.rel (%p252) target = $region36
      $region35: #{tpu_custom_call.1} parent=5 // pred_region
        %s256 = ssub.s32 %s13, 1
        %s257 = smul.u32 %s23, 16
        %s258 = ssub.s32 %s257, 1
        %p259 = scmp.gt.s32.totalorder %s258, 0
        %s260 = scalar_select %p259, %s258, 0
        %p261 = scmp.lt.s32.totalorder %s22, 1
        %s262 = scalar_select %p261, %s22, 1
        %p263 = scmp.lt.s32.totalorder %s260, 15
        %s264 = scalar_select %p263, %s260, 15
        %s265 = smul.addr %s264, 2
        %s266 = smul.addr %s262, 32
        %s267 = sadd.s32 %s265, %s266
        %s268 = smul.addr %s267, 8
        %s269 = scalar_lea.vmem %s0, %s268
        %p270 = pneg %p61
        %p271 = pneg %p58
        %s272 = smul.u32 16, %s23
        %p273 = scmp.lt.s32.totalorder %s22, 1
        %s274 = scalar_select %p273, %s22, 1
        %p275 = scmp.lt.s32.totalorder %s272, 15
        %s276 = scalar_select %p275, %s272, 15
        %s277 = smul.addr %s276, 2
        %s278 = smul.addr %s274, 32
        %s279 = sadd.s32 %s277, %s278
        %s280 = smul.addr %s279, 8
        %s281 = scalar_lea.vmem %s1, %s280
        %p282 = pneg %p89
        %p283 = pneg %p86
        %s284 = smul.u32 %s23, 16
        %s285 = sadd.s32 %s284, 16
        %p286 = scmp.lt.s32.totalorder %s285, 15
        %s287 = scalar_select %p286, %s285, 15
        %p288 = scmp.lt.s32.totalorder %s22, 1
        %s289 = scalar_select %p288, %s22, 1
        %p290 = scmp.lt.s32.totalorder %s287, 15
        %s291 = scalar_select %p290, %s287, 15
        %s292 = smul.addr %s291, 2
        %s293 = smul.addr %s289, 32
        %s294 = sadd.s32 %s292, %s293
        %s295 = smul.addr %s294, 8
        %s296 = scalar_lea.vmem %s2, %s295
        %p297 = pneg %p125
        %p298 = pneg %p122
        %p299 = pneg %p146
        %p300 = pneg %p143
        %p301 = pneg %p174
        %p302 = pneg %p171
        %s303 = sand.u32 %s161, 1
        %s304 = scalar_lea.sflag [#allocation3], %s303
        %s305 = sand.u32 %s161, 1
        %s306 = smul.addr %s305, 16
        %s307 = scalar_lea.vmem [#allocation2], %s306
        %s308 = smul.u32 %s23, 16
        %s309 = ssub.s32 %s308, 1
        %p310 = scmp.gt.s32.totalorder %s309, 0
        %s311 = scalar_select %p310, %s309, 0
        %p312 = scmp.lt.s32.totalorder %s22, 1
        %s313 = scalar_select %p312, %s22, 1
        %p314 = scmp.lt.s32.totalorder %s311, 15
        %s315 = scalar_select %p314, %s311, 15
        %s316 = smul.addr %s315, 2
        %s317 = smul.addr %s313, 32
        %s318 = sadd.s32 %s316, %s317
        %s319 = smul.addr %s318, 8
        %s320 = scalar_lea.vmem %s0, %s319
        %s321 = smul.u32 %s23, 16
        %s322 = ssub.s32 %s321, 1
        %p323 = scmp.gt.s32.totalorder %s322, 0
        %s324 = scalar_select %p323, %s322, 0
        %s325 = smul.u32 16, %s23
        %p326 = scmp.lt.s32.totalorder %s22, 1
        %s327 = scalar_select %p326, %s22, 1
        %p328 = scmp.lt.s32.totalorder %s325, 15
        %s329 = scalar_select %p328, %s325, 15
        %s330 = smul.addr %s329, 2
        %s331 = smul.addr %s327, 32
        %s332 = sadd.s32 %s330, %s331
        %s333 = smul.addr %s332, 8
        %s334 = scalar_lea.vmem %s1, %s333
        %s335 = smul.u32 16, %s23
        %s336 = smul.u32 %s23, 16
        %s337 = sadd.s32 %s336, 16
        %p338 = scmp.lt.s32.totalorder %s337, 15
        %s339 = scalar_select %p338, %s337, 15
        %p340 = scmp.lt.s32.totalorder %s22, 1
        %s341 = scalar_select %p340, %s22, 1
        %p342 = scmp.lt.s32.totalorder %s339, 15
        %s343 = scalar_select %p342, %s339, 15
        %s344 = smul.addr %s343, 2
        %s345 = smul.addr %s341, 32
        %s346 = sadd.s32 %s344, %s345
        %s347 = smul.addr %s346, 8
        %s348 = scalar_lea.vmem %s2, %s347
        %s349 = smul.u32 %s23, 16
        %s350 = sadd.s32 %s349, 16
        %p351 = scmp.lt.s32.totalorder %s350, 15
        %s352 = scalar_select %p351, %s350, 15
        %s353 = smul.u32 2, %s23
        %p354 = scmp.eq.s32.totalorder %s23, 0
        %v355 = vld [vmem:[%s320] sm:$0xff]
        %v356 = vld [vmem:[%s320 + $0x8] sm:$0xff]
        %s357 = scalar_select %p354, 1, 0
        %v358 = vstv %s357
        %vm359 = vcmp.eq.s32.totalorder %v358, 1
        %v360 = vsel %vm359, 0.0, %v355
        %v361 = vsel %vm359, 0.0, %v356
        %v362 = vld [vmem:[%s348] sm:$0xff]
        %v363 = vld [vmem:[%s348 + $0x8] sm:$0xff]
        %v364 = vsel %vm359, 0.0, %v362
        %v365 = vsel %vm359, 0.0, %v363
        %v366 = vld [vmem:[%s334] sm:$0xff]
        %v367 = vld [vmem:[%s334 + $0x8] sm:$0xff]
        %v368 = vld [vmem:[%s334 + $0x10] sm:$0xff]
        %v369 = vld [vmem:[%s334 + $0x18] sm:$0xff]
        %v370 = vld [vmem:[%s334 + $0x20] sm:$0xff]
        %v371 = vld [vmem:[%s334 + $0x28] sm:$0xff]
        %v372 = vld [vmem:[%s334 + $0x30] sm:$0xff]
        %v373 = vld [vmem:[%s334 + $0x38] sm:$0xff]
        %v374 = vld [vmem:[%s334 + $0x40] sm:$0xff]
        %v375 = vld [vmem:[%s334 + $0x48] sm:$0xff]
        %v376 = vld [vmem:[%s334 + $0x50] sm:$0xff]
        %v377 = vld [vmem:[%s334 + $0x58] sm:$0xff]
        %v378 = vld [vmem:[%s334 + $0x60] sm:$0xff]
        %v379 = vld [vmem:[%s334 + $0x68] sm:$0xff]
        %v380 = vld [vmem:[%s334 + $0x70] sm:$0xff]
        %v381 = vld [vmem:[%s334 + $0x78] sm:$0xff]
        %v382 = vld [vmem:[%s334 + $0x80] sm:$0xff]
        %v383 = vld [vmem:[%s334 + $0x88] sm:$0xff]
        %v384 = vld [vmem:[%s334 + $0x90] sm:$0xff]
        %v385 = vld [vmem:[%s334 + $0x98] sm:$0xff]
        %v386 = vld [vmem:[%s334 + $0xa0] sm:$0xff]
        %v387 = vld [vmem:[%s334 + $0xa8] sm:$0xff]
        %v388 = vld [vmem:[%s334 + $0xb0] sm:$0xff]
        %v389 = vld [vmem:[%s334 + $0xb8] sm:$0xff]
        %v390 = vld [vmem:[%s334 + $0xc0] sm:$0xff]
        %v391 = vld [vmem:[%s334 + $0xc8] sm:$0xff]
        %v392 = vld [vmem:[%s334 + $0xd0] sm:$0xff]
        %v393 = vld [vmem:[%s334 + $0xd8] sm:$0xff]
        %v394 = vld [vmem:[%s334 + $0xe0] sm:$0xff]
        %v395 = vld [vmem:[%s334 + $0xe8] sm:$0xff]
        %v396 = vld [vmem:[%s334 + $0xf0] sm:$0xff]
        %v397 = vld [vmem:[%s334 + $0xf8] sm:$0xff]
        %vm434 = vcmask 1040384
        %v435 = vrot.slane %v360, 7
        %v436 = vrot.slane %v361, 7
        %v437 = vsel %vm434, %v435, %v436
        %v438 = vrot.slane %v366, 7
        %v439 = vrot.slane %v367, 7
        %v440 = vsel %vm434, %v438, %v439
        %v441 = vrot.slane %v368, 7
        %v442 = vrot.slane %v369, 7
        %v443 = vsel %vm434, %v441, %v442
        %v444 = vrot.slane %v370, 7
        %v445 = vrot.slane %v371, 7
        %v446 = vsel %vm434, %v444, %v445
        %v447 = vrot.slane %v372, 7
        %v448 = vrot.slane %v373, 7
        %v449 = vsel %vm434, %v447, %v448
        %v450 = vrot.slane %v374, 7
        %v451 = vrot.slane %v375, 7
        %v452 = vsel %vm434, %v450, %v451
        %v453 = vrot.slane %v376, 7
        %v454 = vrot.slane %v377, 7
        %v455 = vsel %vm434, %v453, %v454
        %v456 = vrot.slane %v378, 7
        %v457 = vrot.slane %v379, 7
        %v458 = vsel %vm434, %v456, %v457
        %v459 = vrot.slane %v380, 7
        %v460 = vrot.slane %v381, 7
        %v461 = vsel %vm434, %v459, %v460
        %v462 = vrot.slane %v382, 7
        %v463 = vrot.slane %v383, 7
        %v464 = vsel %vm434, %v462, %v463
        %v465 = vrot.slane %v384, 7
        %v466 = vrot.slane %v385, 7
        %v467 = vsel %vm434, %v465, %v466
        %v468 = vrot.slane %v386, 7
        %v469 = vrot.slane %v387, 7
        %v470 = vsel %vm434, %v468, %v469
        %v471 = vrot.slane %v388, 7
        %v472 = vrot.slane %v389, 7
        %v473 = vsel %vm434, %v471, %v472
        %v474 = vrot.slane %v390, 7
        %v475 = vrot.slane %v391, 7
        %v476 = vsel %vm434, %v474, %v475
        %v477 = vrot.slane %v392, 7
        %v478 = vrot.slane %v393, 7
        %v479 = vsel %vm434, %v477, %v478
        %v480 = vrot.slane %v394, 7
        %v481 = vrot.slane %v395, 7
        %v482 = vsel %vm434, %v480, %v481
        %v483 = vrot.slane %v396, 7
        %v484 = vrot.slane %v397, 7
        %v485 = vsel %vm434, %v483, %v484
        %v486 = vrot.slane %v364, 7
        %v487 = vrot.slane %v365, 7
        %v488 = vsel %vm434, %v486, %v487
        %v523 = vsel %vm434, 0.0, %v435
        %v524 = vsel %vm434, 0.0, %v438
        %v525 = vsel %vm434, 0.0, %v441
        %v526 = vsel %vm434, 0.0, %v444
        %v527 = vsel %vm434, 0.0, %v447
        %v528 = vsel %vm434, 0.0, %v450
        %v529 = vsel %vm434, 0.0, %v453
        %v530 = vsel %vm434, 0.0, %v456
        %v531 = vsel %vm434, 0.0, %v459
        %v532 = vsel %vm434, 0.0, %v462
        %v533 = vsel %vm434, 0.0, %v465
        %v534 = vsel %vm434, 0.0, %v468
        %v535 = vsel %vm434, 0.0, %v471
        %v536 = vsel %vm434, 0.0, %v474
        %v537 = vsel %vm434, 0.0, %v477
        %v538 = vsel %vm434, 0.0, %v480
        %v539 = vsel %vm434, 0.0, %v483
        %v540 = vsel %vm434, 0.0, %v486
        %vm541 = vcmask 1046528
        %v542 = vrot.slane %v360, 1
        %v543 = vrot.slane %v361, 1
        %v544 = vsel %vm541, %v542, %v543
        %v545 = vrot.slane %v366, 1
        %v546 = vrot.slane %v367, 1
        %v547 = vsel %vm541, %v545, %v546
        %v548 = vrot.slane %v368, 1
        %v549 = vrot.slane %v369, 1
        %v550 = vsel %vm541, %v548, %v549
        %v551 = vrot.slane %v370, 1
        %v552 = vrot.slane %v371, 1
        %v553 = vsel %vm541, %v551, %v552
        %v554 = vrot.slane %v372, 1
        %v555 = vrot.slane %v373, 1
        %v556 = vsel %vm541, %v554, %v555
        %v557 = vrot.slane %v374, 1
        %v558 = vrot.slane %v375, 1
        %v559 = vsel %vm541, %v557, %v558
        %v560 = vrot.slane %v376, 1
        %v561 = vrot.slane %v377, 1
        %v562 = vsel %vm541, %v560, %v561
        %v563 = vrot.slane %v378, 1
        %v564 = vrot.slane %v379, 1
        %v565 = vsel %vm541, %v563, %v564
        %v566 = vrot.slane %v380, 1
        %v567 = vrot.slane %v381, 1
        %v568 = vsel %vm541, %v566, %v567
        %v569 = vrot.slane %v382, 1
        %v570 = vrot.slane %v383, 1
        %v571 = vsel %vm541, %v569, %v570
        %v572 = vrot.slane %v384, 1
        %v573 = vrot.slane %v385, 1
        %v574 = vsel %vm541, %v572, %v573
        %v575 = vrot.slane %v386, 1
        %v576 = vrot.slane %v387, 1
        %v577 = vsel %vm541, %v575, %v576
        %v578 = vrot.slane %v388, 1
        %v579 = vrot.slane %v389, 1
        %v580 = vsel %vm541, %v578, %v579
        %v581 = vrot.slane %v390, 1
        %v582 = vrot.slane %v391, 1
        %v583 = vsel %vm541, %v581, %v582
        %v584 = vrot.slane %v392, 1
        %v585 = vrot.slane %v393, 1
        %v586 = vsel %vm541, %v584, %v585
        %v587 = vrot.slane %v394, 1
        %v588 = vrot.slane %v395, 1
        %v589 = vsel %vm541, %v587, %v588
        %v590 = vrot.slane %v396, 1
        %v591 = vrot.slane %v397, 1
        %v592 = vsel %vm541, %v590, %v591
        %v593 = vrot.slane %v364, 1
        %v594 = vrot.slane %v365, 1
        %v595 = vsel %vm541, %v593, %v594
        %v614 = vsel %vm541, %v543, 0.0
        %v615 = vsel %vm541, %v546, 0.0
        %v616 = vsel %vm541, %v549, 0.0
        %v617 = vsel %vm541, %v552, 0.0
        %v618 = vsel %vm541, %v555, 0.0
        %v619 = vsel %vm541, %v558, 0.0
        %v620 = vsel %vm541, %v561, 0.0
        %v621 = vsel %vm541, %v564, 0.0
        %v622 = vsel %vm541, %v567, 0.0
        %v623 = vsel %vm541, %v570, 0.0
        %v624 = vsel %vm541, %v573, 0.0
        %v625 = vsel %vm541, %v576, 0.0
        %v626 = vsel %vm541, %v579, 0.0
        %v627 = vsel %vm541, %v582, 0.0
        %v628 = vsel %vm541, %v585, 0.0
        %v629 = vsel %vm541, %v588, 0.0
        %v630 = vsel %vm541, %v591, 0.0
        %v631 = vsel %vm541, %v594, 0.0
        %632 = vrot.lane.b32.xlu0 %v360, 4
        %v633 = vpop.permute.xlu0 %632
        %634 = vrot.lane.b32.xlu0 %v361, 4
        %v635 = vpop.permute.xlu0 %634
        %636 = vrot.lane.b32.xlu0 %v366, 4
        %v637 = vpop.permute.xlu0 %636
        %638 = vrot.lane.b32.xlu0 %v367, 4
        %v639 = vpop.permute.xlu0 %638
        %640 = vrot.lane.b32.xlu0 %v368, 4
        %v641 = vpop.permute.xlu0 %640
        %642 = vrot.lane.b32.xlu0 %v369, 4
        %v643 = vpop.permute.xlu0 %642
        %644 = vrot.lane.b32.xlu0 %v370, 4
        %v645 = vpop.permute.xlu0 %644
        %646 = vrot.lane.b32.xlu0 %v371, 4
        %v647 = vpop.permute.xlu0 %646
        %648 = vrot.lane.b32.xlu0 %v372, 4
        %v649 = vpop.permute.xlu0 %648
        %650 = vrot.lane.b32.xlu0 %v373, 4
        %v651 = vpop.permute.xlu0 %650
        %652 = vrot.lane.b32.xlu0 %v374, 4
        %v653 = vpop.permute.xlu0 %652
        %654 = vrot.lane.b32.xlu0 %v375, 4
        %v655 = vpop.permute.xlu0 %654
        %656 = vrot.lane.b32.xlu0 %v376, 4
        %v657 = vpop.permute.xlu0 %656
        %658 = vrot.lane.b32.xlu0 %v377, 4
        %v659 = vpop.permute.xlu0 %658
        %660 = vrot.lane.b32.xlu0 %v378, 4
        %v661 = vpop.permute.xlu0 %660
        %662 = vrot.lane.b32.xlu0 %v379, 4
        %v663 = vpop.permute.xlu0 %662
        %664 = vrot.lane.b32.xlu0 %v380, 4
        %v665 = vpop.permute.xlu0 %664
        %666 = vrot.lane.b32.xlu0 %v381, 4
        %v667 = vpop.permute.xlu0 %666
        %668 = vrot.lane.b32.xlu0 %v382, 4
        %v669 = vpop.permute.xlu0 %668
        %670 = vrot.lane.b32.xlu0 %v383, 4
        %v671 = vpop.permute.xlu0 %670
        %672 = vrot.lane.b32.xlu0 %v384, 4
        %v673 = vpop.permute.xlu0 %672
        %674 = vrot.lane.b32.xlu0 %v385, 4
        %v675 = vpop.permute.xlu0 %674
        %676 = vrot.lane.b32.xlu0 %v386, 4
        %v677 = vpop.permute.xlu0 %676
        %678 = vrot.lane.b32.xlu0 %v387, 4
        %v679 = vpop.permute.xlu0 %678
        %680 = vrot.lane.b32.xlu0 %v388, 4
        %v681 = vpop.permute.xlu0 %680
        %682 = vrot.lane.b32.xlu0 %v389, 4
        %v683 = vpop.permute.xlu0 %682
        %684 = vrot.lane.b32.xlu0 %v390, 4
        %v685 = vpop.permute.xlu0 %684
        %686 = vrot.lane.b32.xlu0 %v391, 4
        %v687 = vpop.permute.xlu0 %686
        %688 = vrot.lane.b32.xlu0 %v392, 4
        %v689 = vpop.permute.xlu0 %688
        %690 = vrot.lane.b32.xlu0 %v393, 4
        %v691 = vpop.permute.xlu0 %690
        %692 = vrot.lane.b32.xlu0 %v394, 4
        %v693 = vpop.permute.xlu0 %692
        %694 = vrot.lane.b32.xlu0 %v395, 4
        %v695 = vpop.permute.xlu0 %694
        %744 = vrot.lane.b32.xlu0 %v544, 8
        %v745 = vpop.permute.xlu0 %744
        %746 = vrot.lane.b32.xlu0 %v614, 8
        %v747 = vpop.permute.xlu0 %746
        %748 = vrot.lane.b32.xlu0 %v547, 8
        %v749 = vpop.permute.xlu0 %748
        %750 = vrot.lane.b32.xlu0 %v615, 8
        %v751 = vpop.permute.xlu0 %750
        %752 = vrot.lane.b32.xlu0 %v550, 8
        %v753 = vpop.permute.xlu0 %752
        %754 = vrot.lane.b32.xlu0 %v616, 8
        %v755 = vpop.permute.xlu0 %754
        %756 = vrot.lane.b32.xlu0 %v553, 8
        %v757 = vpop.permute.xlu0 %756
        %758 = vrot.lane.b32.xlu0 %v617, 8
        %v759 = vpop.permute.xlu0 %758
        %760 = vrot.lane.b32.xlu0 %v556, 8
        %v761 = vpop.permute.xlu0 %760
        %762 = vrot.lane.b32.xlu0 %v618, 8
        %v763 = vpop.permute.xlu0 %762
        %764 = vrot.lane.b32.xlu0 %v559, 8
        %v765 = vpop.permute.xlu0 %764
        %766 = vrot.lane.b32.xlu0 %v619, 8
        %v767 = vpop.permute.xlu0 %766
        %768 = vrot.lane.b32.xlu0 %v562, 8
        %v769 = vpop.permute.xlu0 %768
        %770 = vrot.lane.b32.xlu0 %v620, 8
        %v771 = vpop.permute.xlu0 %770
        %772 = vrot.lane.b32.xlu0 %v565, 8
        %v773 = vpop.permute.xlu0 %772
        %774 = vrot.lane.b32.xlu0 %v621, 8
        %v775 = vpop.permute.xlu0 %774
        %776 = vrot.lane.b32.xlu0 %v568, 8
        %v777 = vpop.permute.xlu0 %776
        %778 = vrot.lane.b32.xlu0 %v622, 8
        %v779 = vpop.permute.xlu0 %778
        %780 = vrot.lane.b32.xlu0 %v571, 8
        %v781 = vpop.permute.xlu0 %780
        %782 = vrot.lane.b32.xlu0 %v623, 8
        %v783 = vpop.permute.xlu0 %782
        %784 = vrot.lane.b32.xlu0 %v574, 8
        %v785 = vpop.permute.xlu0 %784
        %786 = vrot.lane.b32.xlu0 %v624, 8
        %v787 = vpop.permute.xlu0 %786
        %788 = vrot.lane.b32.xlu0 %v577, 8
        %v789 = vpop.permute.xlu0 %788
        %790 = vrot.lane.b32.xlu0 %v625, 8
        %v791 = vpop.permute.xlu0 %790
        %792 = vrot.lane.b32.xlu0 %v580, 8
        %v793 = vpop.permute.xlu0 %792
        %794 = vrot.lane.b32.xlu0 %v626, 8
        %v795 = vpop.permute.xlu0 %794
        %796 = vrot.lane.b32.xlu0 %v583, 8
        %v797 = vpop.permute.xlu0 %796
        %798 = vrot.lane.b32.xlu0 %v627, 8
        %v799 = vpop.permute.xlu0 %798
        %800 = vrot.lane.b32.xlu0 %v586, 8
        %v801 = vpop.permute.xlu0 %800
        %802 = vrot.lane.b32.xlu0 %v628, 8
        %v803 = vpop.permute.xlu0 %802
        %804 = vrot.lane.b32.xlu0 %v589, 8
        %v805 = vpop.permute.xlu0 %804
        %806 = vrot.lane.b32.xlu0 %v629, 8
        %v807 = vpop.permute.xlu0 %806
        %856 = vrot.lane.b32.xlu0 %v524, 12
        %v857 = vpop.permute.xlu0 %856
        %858 = vrot.lane.b32.xlu0 %v440, 12
        %v859 = vpop.permute.xlu0 %858
        %860 = vrot.lane.b32.xlu0 %v525, 12
        %v861 = vpop.permute.xlu0 %860
        %862 = vrot.lane.b32.xlu0 %v443, 12
        %v863 = vpop.permute.xlu0 %862
        %864 = vrot.lane.b32.xlu0 %v526, 12
        %v865 = vpop.permute.xlu0 %864
        %866 = vrot.lane.b32.xlu0 %v446, 12
        %v867 = vpop.permute.xlu0 %866
        %868 = vrot.lane.b32.xlu0 %v527, 12
        %v869 = vpop.permute.xlu0 %868
        %870 = vrot.lane.b32.xlu0 %v449, 12
        %v871 = vpop.permute.xlu0 %870
        %872 = vrot.lane.b32.xlu0 %v528, 12
        %v873 = vpop.permute.xlu0 %872
        %874 = vrot.lane.b32.xlu0 %v452, 12
        %v875 = vpop.permute.xlu0 %874
        %876 = vrot.lane.b32.xlu0 %v529, 12
        %v877 = vpop.permute.xlu0 %876
        %878 = vrot.lane.b32.xlu0 %v455, 12
        %v879 = vpop.permute.xlu0 %878
        %880 = vrot.lane.b32.xlu0 %v530, 12
        %v881 = vpop.permute.xlu0 %880
        %882 = vrot.lane.b32.xlu0 %v458, 12
        %v883 = vpop.permute.xlu0 %882
        %884 = vrot.lane.b32.xlu0 %v531, 12
        %v885 = vpop.permute.xlu0 %884
        %886 = vrot.lane.b32.xlu0 %v461, 12
        %v887 = vpop.permute.xlu0 %886
        %888 = vrot.lane.b32.xlu0 %v532, 12
        %v889 = vpop.permute.xlu0 %888
        %890 = vrot.lane.b32.xlu0 %v464, 12
        %v891 = vpop.permute.xlu0 %890
        %892 = vrot.lane.b32.xlu0 %v533, 12
        %v893 = vpop.permute.xlu0 %892
        %894 = vrot.lane.b32.xlu0 %v467, 12
        %v895 = vpop.permute.xlu0 %894
        %896 = vrot.lane.b32.xlu0 %v534, 12
        %v897 = vpop.permute.xlu0 %896
        %898 = vrot.lane.b32.xlu0 %v470, 12
        %v899 = vpop.permute.xlu0 %898
        %900 = vrot.lane.b32.xlu0 %v535, 12
        %v901 = vpop.permute.xlu0 %900
        %902 = vrot.lane.b32.xlu0 %v473, 12
        %v903 = vpop.permute.xlu0 %902
        %904 = vrot.lane.b32.xlu0 %v536, 12
        %v905 = vpop.permute.xlu0 %904
        %906 = vrot.lane.b32.xlu0 %v476, 12
        %v907 = vpop.permute.xlu0 %906
        %908 = vrot.lane.b32.xlu0 %v537, 12
        %v909 = vpop.permute.xlu0 %908
        %910 = vrot.lane.b32.xlu0 %v479, 12
        %v911 = vpop.permute.xlu0 %910
        %912 = vrot.lane.b32.xlu0 %v538, 12
        %v913 = vpop.permute.xlu0 %912
        %914 = vrot.lane.b32.xlu0 %v482, 12
        %v915 = vpop.permute.xlu0 %914
        %916 = vrot.lane.b32.xlu0 %v539, 12
        %v917 = vpop.permute.xlu0 %916
        %918 = vrot.lane.b32.xlu0 %v485, 12
        %v919 = vpop.permute.xlu0 %918
        %952 = vrot.lane.b32.xlu0 %v366, 16
        %v953 = vpop.permute.xlu0 %952
        %954 = vrot.lane.b32.xlu0 %v367, 16
        %v955 = vpop.permute.xlu0 %954
        %956 = vrot.lane.b32.xlu0 %v368, 16
        %v957 = vpop.permute.xlu0 %956
        %958 = vrot.lane.b32.xlu0 %v369, 16
        %v959 = vpop.permute.xlu0 %958
        %960 = vrot.lane.b32.xlu0 %v370, 16
        %v961 = vpop.permute.xlu0 %960
        %962 = vrot.lane.b32.xlu0 %v371, 16
        %v963 = vpop.permute.xlu0 %962
        %964 = vrot.lane.b32.xlu0 %v372, 16
        %v965 = vpop.permute.xlu0 %964
        %966 = vrot.lane.b32.xlu0 %v373, 16
        %v967 = vpop.permute.xlu0 %966
        %968 = vrot.lane.b32.xlu0 %v374, 16
        %v969 = vpop.permute.xlu0 %968
        %970 = vrot.lane.b32.xlu0 %v375, 16
        %v971 = vpop.permute.xlu0 %970
        %972 = vrot.lane.b32.xlu0 %v376, 16
        %v973 = vpop.permute.xlu0 %972
        %974 = vrot.lane.b32.xlu0 %v377, 16
        %v975 = vpop.permute.xlu0 %974
        %976 = vrot.lane.b32.xlu0 %v378, 16
        %v977 = vpop.permute.xlu0 %976
        %978 = vrot.lane.b32.xlu0 %v379, 16
        %v979 = vpop.permute.xlu0 %978
        %980 = vrot.lane.b32.xlu0 %v380, 16
        %v981 = vpop.permute.xlu0 %980
        %982 = vrot.lane.b32.xlu0 %v381, 16
        %v983 = vpop.permute.xlu0 %982
        %984 = vrot.lane.b32.xlu0 %v382, 16
        %v985 = vpop.permute.xlu0 %984
        %986 = vrot.lane.b32.xlu0 %v383, 16
        %v987 = vpop.permute.xlu0 %986
        %988 = vrot.lane.b32.xlu0 %v384, 16
        %v989 = vpop.permute.xlu0 %988
        %990 = vrot.lane.b32.xlu0 %v385, 16
        %v991 = vpop.permute.xlu0 %990
        %992 = vrot.lane.b32.xlu0 %v386, 16
        %v993 = vpop.permute.xlu0 %992
        %994 = vrot.lane.b32.xlu0 %v387, 16
        %v995 = vpop.permute.xlu0 %994
        %996 = vrot.lane.b32.xlu0 %v388, 16
        %v997 = vpop.permute.xlu0 %996
        %998 = vrot.lane.b32.xlu0 %v389, 16
        %v999 = vpop.permute.xlu0 %998
        %1000 = vrot.lane.b32.xlu0 %v390, 16
        %v1001 = vpop.permute.xlu0 %1000
        %1002 = vrot.lane.b32.xlu0 %v391, 16
        %v1003 = vpop.permute.xlu0 %1002
        %1004 = vrot.lane.b32.xlu0 %v392, 16
        %v1005 = vpop.permute.xlu0 %1004
        %1006 = vrot.lane.b32.xlu0 %v393, 16
        %v1007 = vpop.permute.xlu0 %1006
        %1008 = vrot.lane.b32.xlu0 %v394, 16
        %v1009 = vpop.permute.xlu0 %1008
        %1010 = vrot.lane.b32.xlu0 %v395, 16
        %v1011 = vpop.permute.xlu0 %1010
        %1012 = vrot.lane.b32.xlu0 %v396, 16
        %v1013 = vpop.permute.xlu0 %1012
        %1014 = vrot.lane.b32.xlu0 %v397, 16
        %v1015 = vpop.permute.xlu0 %1014
        %1049 = vrot.lane.b32.xlu0 %v547, 20
        %v1050 = vpop.permute.xlu0 %1049
        %1051 = vrot.lane.b32.xlu0 %v615, 20
        %v1052 = vpop.permute.xlu0 %1051
        %1053 = vrot.lane.b32.xlu0 %v550, 20
        %v1054 = vpop.permute.xlu0 %1053
        %1055 = vrot.lane.b32.xlu0 %v616, 20
        %v1056 = vpop.permute.xlu0 %1055
        %1057 = vrot.lane.b32.xlu0 %v553, 20
        %v1058 = vpop.permute.xlu0 %1057
        %1059 = vrot.lane.b32.xlu0 %v617, 20
        %v1060 = vpop.permute.xlu0 %1059
        %1061 = vrot.lane.b32.xlu0 %v556, 20
        %v1062 = vpop.permute.xlu0 %1061
        %1063 = vrot.lane.b32.xlu0 %v618, 20
        %v1064 = vpop.permute.xlu0 %1063
        %1065 = vrot.lane.b32.xlu0 %v559, 20
        %v1066 = vpop.permute.xlu0 %1065
        %1067 = vrot.lane.b32.xlu0 %v619, 20
        %v1068 = vpop.permute.xlu0 %1067
        %1069 = vrot.lane.b32.xlu0 %v562, 20
        %v1070 = vpop.permute.xlu0 %1069
        %1071 = vrot.lane.b32.xlu0 %v620, 20
        %v1072 = vpop.permute.xlu0 %1071
        %1073 = vrot.lane.b32.xlu0 %v565, 20
        %v1074 = vpop.permute.xlu0 %1073
        %1075 = vrot.lane.b32.xlu0 %v621, 20
        %v1076 = vpop.permute.xlu0 %1075
        %1077 = vrot.lane.b32.xlu0 %v568, 20
        %v1078 = vpop.permute.xlu0 %1077
        %1079 = vrot.lane.b32.xlu0 %v622, 20
        %v1080 = vpop.permute.xlu0 %1079
        %1081 = vrot.lane.b32.xlu0 %v571, 20
        %v1082 = vpop.permute.xlu0 %1081
        %1083 = vrot.lane.b32.xlu0 %v623, 20
        %v1084 = vpop.permute.xlu0 %1083
        %1085 = vrot.lane.b32.xlu0 %v574, 20
        %v1086 = vpop.permute.xlu0 %1085
        %1087 = vrot.lane.b32.xlu0 %v624, 20
        %v1088 = vpop.permute.xlu0 %1087
        %1089 = vrot.lane.b32.xlu0 %v577, 20
        %v1090 = vpop.permute.xlu0 %1089
        %1091 = vrot.lane.b32.xlu0 %v625, 20
        %v1092 = vpop.permute.xlu0 %1091
        %1093 = vrot.lane.b32.xlu0 %v580, 20
        %v1094 = vpop.permute.xlu0 %1093
        %1095 = vrot.lane.b32.xlu0 %v626, 20
        %v1096 = vpop.permute.xlu0 %1095
        %1097 = vrot.lane.b32.xlu0 %v583, 20
        %v1098 = vpop.permute.xlu0 %1097
        %1099 = vrot.lane.b32.xlu0 %v627, 20
        %v1100 = vpop.permute.xlu0 %1099
        %1101 = vrot.lane.b32.xlu0 %v586, 20
        %v1102 = vpop.permute.xlu0 %1101
        %1103 = vrot.lane.b32.xlu0 %v628, 20
        %v1104 = vpop.permute.xlu0 %1103
        %1105 = vrot.lane.b32.xlu0 %v589, 20
        %v1106 = vpop.permute.xlu0 %1105
        %1107 = vrot.lane.b32.xlu0 %v629, 20
        %v1108 = vpop.permute.xlu0 %1107
        %1109 = vrot.lane.b32.xlu0 %v592, 20
        %v1110 = vpop.permute.xlu0 %1109
        %1111 = vrot.lane.b32.xlu0 %v630, 20
        %v1112 = vpop.permute.xlu0 %1111
        %1146 = vrot.lane.b32.xlu0 %v525, 24
        %v1147 = vpop.permute.xlu0 %1146
        %1148 = vrot.lane.b32.xlu0 %v443, 24
        %v1149 = vpop.permute.xlu0 %1148
        %1150 = vrot.lane.b32.xlu0 %v526, 24
        %v1151 = vpop.permute.xlu0 %1150
        %1152 = vrot.lane.b32.xlu0 %v446, 24
        %v1153 = vpop.permute.xlu0 %1152
        %1154 = vrot.lane.b32.xlu0 %v527, 24
        %v1155 = vpop.permute.xlu0 %1154
        %1156 = vrot.lane.b32.xlu0 %v449, 24
        %v1157 = vpop.permute.xlu0 %1156
        %1158 = vrot.lane.b32.xlu0 %v528, 24
        %v1159 = vpop.permute.xlu0 %1158
        %1160 = vrot.lane.b32.xlu0 %v452, 24
        %v1161 = vpop.permute.xlu0 %1160
        %1162 = vrot.lane.b32.xlu0 %v529, 24
        %v1163 = vpop.permute.xlu0 %1162
        %1164 = vrot.lane.b32.xlu0 %v455, 24
        %v1165 = vpop.permute.xlu0 %1164
        %1166 = vrot.lane.b32.xlu0 %v530, 24
        %v1167 = vpop.permute.xlu0 %1166
        %1168 = vrot.lane.b32.xlu0 %v458, 24
        %v1169 = vpop.permute.xlu0 %1168
        %1170 = vrot.lane.b32.xlu0 %v531, 24
        %v1171 = vpop.permute.xlu0 %1170
        %1172 = vrot.lane.b32.xlu0 %v461, 24
        %v1173 = vpop.permute.xlu0 %1172
        %1174 = vrot.lane.b32.xlu0 %v532, 24
        %v1175 = vpop.permute.xlu0 %1174
        %1176 = vrot.lane.b32.xlu0 %v464, 24
        %v1177 = vpop.permute.xlu0 %1176
        %1178 = vrot.lane.b32.xlu0 %v533, 24
        %v1179 = vpop.permute.xlu0 %1178
        %1180 = vrot.lane.b32.xlu0 %v467, 24
        %v1181 = vpop.permute.xlu0 %1180
        %1182 = vrot.lane.b32.xlu0 %v534, 24
        %v1183 = vpop.permute.xlu0 %1182
        %1184 = vrot.lane.b32.xlu0 %v470, 24
        %v1185 = vpop.permute.xlu0 %1184
        %1186 = vrot.lane.b32.xlu0 %v535, 24
        %v1187 = vpop.permute.xlu0 %1186
        %1188 = vrot.lane.b32.xlu0 %v473, 24
        %v1189 = vpop.permute.xlu0 %1188
        %1190 = vrot.lane.b32.xlu0 %v536, 24
        %v1191 = vpop.permute.xlu0 %1190
        %1192 = vrot.lane.b32.xlu0 %v476, 24
        %v1193 = vpop.permute.xlu0 %1192
        %1194 = vrot.lane.b32.xlu0 %v537, 24
        %v1195 = vpop.permute.xlu0 %1194
        %1196 = vrot.lane.b32.xlu0 %v479, 24
        %v1197 = vpop.permute.xlu0 %1196
        %1198 = vrot.lane.b32.xlu0 %v538, 24
        %v1199 = vpop.permute.xlu0 %1198
        %1200 = vrot.lane.b32.xlu0 %v482, 24
        %v1201 = vpop.permute.xlu0 %1200
        %1202 = vrot.lane.b32.xlu0 %v539, 24
        %v1203 = vpop.permute.xlu0 %1202
        %1204 = vrot.lane.b32.xlu0 %v485, 24
        %v1205 = vpop.permute.xlu0 %1204
        %1206 = vrot.lane.b32.xlu0 %v540, 24
        %v1207 = vpop.permute.xlu0 %1206
        %1208 = vrot.lane.b32.xlu0 %v488, 24
        %v1209 = vpop.permute.xlu0 %1208
        %1242 = vrot.lane.b32.xlu0 %v368, 28
        %v1243 = vpop.permute.xlu0 %1242
        %1244 = vrot.lane.b32.xlu0 %v369, 28
        %v1245 = vpop.permute.xlu0 %1244
        %1246 = vrot.lane.b32.xlu0 %v370, 28
        %v1247 = vpop.permute.xlu0 %1246
        %1248 = vrot.lane.b32.xlu0 %v371, 28
        %v1249 = vpop.permute.xlu0 %1248
        %1250 = vrot.lane.b32.xlu0 %v372, 28
        %v1251 = vpop.permute.xlu0 %1250
        %1252 = vrot.lane.b32.xlu0 %v373, 28
        %v1253 = vpop.permute.xlu0 %1252
        %1254 = vrot.lane.b32.xlu0 %v374, 28
        %v1255 = vpop.permute.xlu0 %1254
        %1256 = vrot.lane.b32.xlu0 %v375, 28
        %v1257 = vpop.permute.xlu0 %1256
        %1258 = vrot.lane.b32.xlu0 %v376, 28
        %v1259 = vpop.permute.xlu0 %1258
        %1260 = vrot.lane.b32.xlu0 %v377, 28
        %v1261 = vpop.permute.xlu0 %1260
        %1262 = vrot.lane.b32.xlu0 %v378, 28
        %v1263 = vpop.permute.xlu0 %1262
        %1264 = vrot.lane.b32.xlu0 %v379, 28
        %v1265 = vpop.permute.xlu0 %1264
        %1266 = vrot.lane.b32.xlu0 %v380, 28
        %v1267 = vpop.permute.xlu0 %1266
        %1268 = vrot.lane.b32.xlu0 %v381, 28
        %v1269 = vpop.permute.xlu0 %1268
        %1270 = vrot.lane.b32.xlu0 %v382, 28
        %v1271 = vpop.permute.xlu0 %1270
        %1272 = vrot.lane.b32.xlu0 %v383, 28
        %v1273 = vpop.permute.xlu0 %1272
        %1274 = vrot.lane.b32.xlu0 %v384, 28
        %v1275 = vpop.permute.xlu0 %1274
        %1276 = vrot.lane.b32.xlu0 %v385, 28
        %v1277 = vpop.permute.xlu0 %1276
        %1278 = vrot.lane.b32.xlu0 %v386, 28
        %v1279 = vpop.permute.xlu0 %1278
        %1280 = vrot.lane.b32.xlu0 %v387, 28
        %v1281 = vpop.permute.xlu0 %1280
        %1282 = vrot.lane.b32.xlu0 %v388, 28
        %v1283 = vpop.permute.xlu0 %1282
        %1284 = vrot.lane.b32.xlu0 %v389, 28
        %v1285 = vpop.permute.xlu0 %1284
        %1286 = vrot.lane.b32.xlu0 %v390, 28
        %v1287 = vpop.permute.xlu0 %1286
        %1288 = vrot.lane.b32.xlu0 %v391, 28
        %v1289 = vpop.permute.xlu0 %1288
        %1290 = vrot.lane.b32.xlu0 %v392, 28
        %v1291 = vpop.permute.xlu0 %1290
        %1292 = vrot.lane.b32.xlu0 %v393, 28
        %v1293 = vpop.permute.xlu0 %1292
        %1294 = vrot.lane.b32.xlu0 %v394, 28
        %v1295 = vpop.permute.xlu0 %1294
        %1296 = vrot.lane.b32.xlu0 %v395, 28
        %v1297 = vpop.permute.xlu0 %1296
        %1298 = vrot.lane.b32.xlu0 %v396, 28
        %v1299 = vpop.permute.xlu0 %1298
        %1300 = vrot.lane.b32.xlu0 %v397, 28
        %v1301 = vpop.permute.xlu0 %1300
        %1302 = vrot.lane.b32.xlu0 %v364, 28
        %v1303 = vpop.permute.xlu0 %1302
        %1304 = vrot.lane.b32.xlu0 %v365, 28
        %v1305 = vpop.permute.xlu0 %1304
        %1339 = vrot.lane.b32.xlu0 %v550, 32
        %v1340 = vpop.permute.xlu0 %1339
        %1341 = vrot.lane.b32.xlu0 %v616, 32
        %v1342 = vpop.permute.xlu0 %1341
        %1343 = vrot.lane.b32.xlu0 %v553, 32
        %v1344 = vpop.permute.xlu0 %1343
        %1345 = vrot.lane.b32.xlu0 %v617, 32
        %v1346 = vpop.permute.xlu0 %1345
        %1347 = vrot.lane.b32.xlu0 %v556, 32
        %v1348 = vpop.permute.xlu0 %1347
        %1349 = vrot.lane.b32.xlu0 %v618, 32
        %v1350 = vpop.permute.xlu0 %1349
        %1351 = vrot.lane.b32.xlu0 %v559, 32
        %v1352 = vpop.permute.xlu0 %1351
        %1353 = vrot.lane.b32.xlu0 %v619, 32
        %v1354 = vpop.permute.xlu0 %1353
        %1355 = vrot.lane.b32.xlu0 %v562, 32
        %v1356 = vpop.permute.xlu0 %1355
        %1357 = vrot.lane.b32.xlu0 %v620, 32
        %v1358 = vpop.permute.xlu0 %1357
        %1359 = vrot.lane.b32.xlu0 %v565, 32
        %v1360 = vpop.permute.xlu0 %1359
        %1361 = vrot.lane.b32.xlu0 %v621, 32
        %v1362 = vpop.permute.xlu0 %1361
        %1363 = vrot.lane.b32.xlu0 %v568, 32
        %v1364 = vpop.permute.xlu0 %1363
        %1365 = vrot.lane.b32.xlu0 %v622, 32
        %v1366 = vpop.permute.xlu0 %1365
        %1367 = vrot.lane.b32.xlu0 %v571, 32
        %v1368 = vpop.permute.xlu0 %1367
        %1369 = vrot.lane.b32.xlu0 %v623, 32
        %v1370 = vpop.permute.xlu0 %1369
        %1371 = vrot.lane.b32.xlu0 %v574, 32
        %v1372 = vpop.permute.xlu0 %1371
        %1373 = vrot.lane.b32.xlu0 %v624, 32
        %v1374 = vpop.permute.xlu0 %1373
        %1375 = vrot.lane.b32.xlu0 %v577, 32
        %v1376 = vpop.permute.xlu0 %1375
        %1377 = vrot.lane.b32.xlu0 %v625, 32
        %v1378 = vpop.permute.xlu0 %1377
        %1379 = vrot.lane.b32.xlu0 %v580, 32
        %v1380 = vpop.permute.xlu0 %1379
        %1381 = vrot.lane.b32.xlu0 %v626, 32
        %v1382 = vpop.permute.xlu0 %1381
        %1383 = vrot.lane.b32.xlu0 %v583, 32
        %v1384 = vpop.permute.xlu0 %1383
        %1385 = vrot.lane.b32.xlu0 %v627, 32
        %v1386 = vpop.permute.xlu0 %1385
        %1387 = vrot.lane.b32.xlu0 %v586, 32
        %v1388 = vpop.permute.xlu0 %1387
        %1389 = vrot.lane.b32.xlu0 %v628, 32
        %v1390 = vpop.permute.xlu0 %1389
        %1391 = vrot.lane.b32.xlu0 %v589, 32
        %v1392 = vpop.permute.xlu0 %1391
        %1393 = vrot.lane.b32.xlu0 %v629, 32
        %v1394 = vpop.permute.xlu0 %1393
        %1395 = vrot.lane.b32.xlu0 %v592, 32
        %v1396 = vpop.permute.xlu0 %1395
        %1397 = vrot.lane.b32.xlu0 %v630, 32
        %v1398 = vpop.permute.xlu0 %1397
        %1399 = vrot.lane.b32.xlu0 %v595, 32
        %v1400 = vpop.permute.xlu0 %1399
        %1401 = vrot.lane.b32.xlu0 %v631, 32
        %v1402 = vpop.permute.xlu0 %1401
        %vm1435 = vcmask 31744
        %v1436 = vsel %vm1435, %v523, %v633
        %v1437 = vsel %vm1435, %v437, %v635
        %v1438 = vsel %vm1435, %v524, %v637
        %v1439 = vsel %vm1435, %v440, %v639
        %v1440 = vsel %vm1435, %v525, %v641
        %v1441 = vsel %vm1435, %v443, %v643
        %v1442 = vsel %vm1435, %v526, %v645
        %v1443 = vsel %vm1435, %v446, %v647
        %v1444 = vsel %vm1435, %v527, %v649
        %v1445 = vsel %vm1435, %v449, %v651
        %v1446 = vsel %vm1435, %v528, %v653
        %v1447 = vsel %vm1435, %v452, %v655
        %v1448 = vsel %vm1435, %v529, %v657
        %v1449 = vsel %vm1435, %v455, %v659
        %v1450 = vsel %vm1435, %v530, %v661
        %v1451 = vsel %vm1435, %v458, %v663
        %v1452 = vsel %vm1435, %v531, %v665
        %v1453 = vsel %vm1435, %v461, %v667
        %v1454 = vsel %vm1435, %v532, %v669
        %v1455 = vsel %vm1435, %v464, %v671
        %v1456 = vsel %vm1435, %v533, %v673
        %v1457 = vsel %vm1435, %v467, %v675
        %v1458 = vsel %vm1435, %v534, %v677
        %v1459 = vsel %vm1435, %v470, %v679
        %v1460 = vsel %vm1435, %v535, %v681
        %v1461 = vsel %vm1435, %v473, %v683
        %v1462 = vsel %vm1435, %v536, %v685
        %v1463 = vsel %vm1435, %v476, %v687
        %v1464 = vsel %vm1435, %v537, %v689
        %v1465 = vsel %vm1435, %v479, %v691
        %v1466 = vsel %vm1435, %v538, %v693
        %v1467 = vsel %vm1435, %v482, %v695
        %vm1468 = vcmask 64512
        %v1469 = vsel %vm1468, %v1436, %v745
        %v1470 = vsel %vm1468, %v1437, %v747
        %v1471 = vsel %vm1468, %v1438, %v749
        %v1472 = vsel %vm1468, %v1439, %v751
        %v1473 = vsel %vm1468, %v1440, %v753
        %v1474 = vsel %vm1468, %v1441, %v755
        %v1475 = vsel %vm1468, %v1442, %v757
        %v1476 = vsel %vm1468, %v1443, %v759
        %v1477 = vsel %vm1468, %v1444, %v761
        %v1478 = vsel %vm1468, %v1445, %v763
        %v1479 = vsel %vm1468, %v1446, %v765
        %v1480 = vsel %vm1468, %v1447, %v767
        %v1481 = vsel %vm1468, %v1448, %v769
        %v1482 = vsel %vm1468, %v1449, %v771
        %v1483 = vsel %vm1468, %v1450, %v773
        %v1484 = vsel %vm1468, %v1451, %v775
        %v1485 = vsel %vm1468, %v1452, %v777
        %v1486 = vsel %vm1468, %v1453, %v779
        %v1487 = vsel %vm1468, %v1454, %v781
        %v1488 = vsel %vm1468, %v1455, %v783
        %v1489 = vsel %vm1468, %v1456, %v785
        %v1490 = vsel %vm1468, %v1457, %v787
        %v1491 = vsel %vm1468, %v1458, %v789
        %v1492 = vsel %vm1468, %v1459, %v791
        %v1493 = vsel %vm1468, %v1460, %v793
        %v1494 = vsel %vm1468, %v1461, %v795
        %v1495 = vsel %vm1468, %v1462, %v797
        %v1496 = vsel %vm1468, %v1463, %v799
        %v1497 = vsel %vm1468, %v1464, %v801
        %v1498 = vsel %vm1468, %v1465, %v803
        %v1499 = vsel %vm1468, %v1466, %v805
        %v1500 = vsel %vm1468, %v1467, %v807
        %vm1501 = vcmask 97280
        %v1502 = vsel %vm1501, %v1469, %v857
        %v1503 = vsel %vm1501, %v1470, %v859
        %v1504 = vsel %vm1501, %v1471, %v861
        %v1505 = vsel %vm1501, %v1472, %v863
        %v1506 = vsel %vm1501, %v1473, %v865
        %v1507 = vsel %vm1501, %v1474, %v867
        %v1508 = vsel %vm1501, %v1475, %v869
        %v1509 = vsel %vm1501, %v1476, %v871
        %v1510 = vsel %vm1501, %v1477, %v873
        %v1511 = vsel %vm1501, %v1478, %v875
        %v1512 = vsel %vm1501, %v1479, %v877
        %v1513 = vsel %vm1501, %v1480, %v879
        %v1514 = vsel %vm1501, %v1481, %v881
        %v1515 = vsel %vm1501, %v1482, %v883
        %v1516 = vsel %vm1501, %v1483, %v885
        %v1517 = vsel %vm1501, %v1484, %v887
        %v1518 = vsel %vm1501, %v1485, %v889
        %v1519 = vsel %vm1501, %v1486, %v891
        %v1520 = vsel %vm1501, %v1487, %v893
        %v1521 = vsel %vm1501, %v1488, %v895
        %v1522 = vsel %vm1501, %v1489, %v897
        %v1523 = vsel %vm1501, %v1490, %v899
        %v1524 = vsel %vm1501, %v1491, %v901
        %v1525 = vsel %vm1501, %v1492, %v903
        %v1526 = vsel %vm1501, %v1493, %v905
        %v1527 = vsel %vm1501, %v1494, %v907
        %v1528 = vsel %vm1501, %v1495, %v909
        %v1529 = vsel %vm1501, %v1496, %v911
        %v1530 = vsel %vm1501, %v1497, %v913
        %v1531 = vsel %vm1501, %v1498, %v915
        %v1532 = vsel %vm1501, %v1499, %v917
        %v1533 = vsel %vm1501, %v1500, %v919
        %vm1534 = vcmask 130048
        %v1535 = vsel %vm1534, %v1502, %v953
        %v1536 = vsel %vm1534, %v1503, %v955
        %v1537 = vsel %vm1534, %v1504, %v957
        %v1538 = vsel %vm1534, %v1505, %v959
        %v1539 = vsel %vm1534, %v1506, %v961
        %v1540 = vsel %vm1534, %v1507, %v963
        %v1541 = vsel %vm1534, %v1508, %v965
        %v1542 = vsel %vm1534, %v1509, %v967
        %v1543 = vsel %vm1534, %v1510, %v969
        %v1544 = vsel %vm1534, %v1511, %v971
        %v1545 = vsel %vm1534, %v1512, %v973
        %v1546 = vsel %vm1534, %v1513, %v975
        %v1547 = vsel %vm1534, %v1514, %v977
        %v1548 = vsel %vm1534, %v1515, %v979
        %v1549 = vsel %vm1534, %v1516, %v981
        %v1550 = vsel %vm1534, %v1517, %v983
        %v1551 = vsel %vm1534, %v1518, %v985
        %v1552 = vsel %vm1534, %v1519, %v987
        %v1553 = vsel %vm1534, %v1520, %v989
        %v1554 = vsel %vm1534, %v1521, %v991
        %v1555 = vsel %vm1534, %v1522, %v993
        %v1556 = vsel %vm1534, %v1523, %v995
        %v1557 = vsel %vm1534, %v1524, %v997
        %v1558 = vsel %vm1534, %v1525, %v999
        %v1559 = vsel %vm1534, %v1526, %v1001
        %v1560 = vsel %vm1534, %v1527, %v1003
        %v1561 = vsel %vm1534, %v1528, %v1005
        %v1562 = vsel %vm1534, %v1529, %v1007
        %v1563 = vsel %vm1534, %v1530, %v1009
        %v1564 = vsel %vm1534, %v1531, %v1011
        %v1565 = vsel %vm1534, %v1532, %v1013
        %v1566 = vsel %vm1534, %v1533, %v1015
        %vm1567 = vcmask 162816
        %v1568 = vsel %vm1567, %v1535, %v1050
        %v1569 = vsel %vm1567, %v1536, %v1052
        %v1570 = vsel %vm1567, %v1537, %v1054
        %v1571 = vsel %vm1567, %v1538, %v1056
        %v1572 = vsel %vm1567, %v1539, %v1058
        %v1573 = vsel %vm1567, %v1540, %v1060
        %v1574 = vsel %vm1567, %v1541, %v1062
        %v1575 = vsel %vm1567, %v1542, %v1064
        %v1576 = vsel %vm1567, %v1543, %v1066
        %v1577 = vsel %vm1567, %v1544, %v1068
        %v1578 = vsel %vm1567, %v1545, %v1070
        %v1579 = vsel %vm1567, %v1546, %v1072
        %v1580 = vsel %vm1567, %v1547, %v1074
        %v1581 = vsel %vm1567, %v1548, %v1076
        %v1582 = vsel %vm1567, %v1549, %v1078
        %v1583 = vsel %vm1567, %v1550, %v1080
        %v1584 = vsel %vm1567, %v1551, %v1082
        %v1585 = vsel %vm1567, %v1552, %v1084
        %v1586 = vsel %vm1567, %v1553, %v1086
        %v1587 = vsel %vm1567, %v1554, %v1088
        %v1588 = vsel %vm1567, %v1555, %v1090
        %v1589 = vsel %vm1567, %v1556, %v1092
        %v1590 = vsel %vm1567, %v1557, %v1094
        %v1591 = vsel %vm1567, %v1558, %v1096
        %v1592 = vsel %vm1567, %v1559, %v1098
        %v1593 = vsel %vm1567, %v1560, %v1100
        %v1594 = vsel %vm1567, %v1561, %v1102
        %v1595 = vsel %vm1567, %v1562, %v1104
        %v1596 = vsel %vm1567, %v1563, %v1106
        %v1597 = vsel %vm1567, %v1564, %v1108
        %v1598 = vsel %vm1567, %v1565, %v1110
        %v1599 = vsel %vm1567, %v1566, %v1112
        %vm1600 = vcmask 195584
        %v1601 = vsel %vm1600, %v1568, %v1147
        %v1602 = vsel %vm1600, %v1569, %v1149
        %v1603 = vsel %vm1600, %v1570, %v1151
        %v1604 = vsel %vm1600, %v1571, %v1153
        %v1605 = vsel %vm1600, %v1572, %v1155
        %v1606 = vsel %vm1600, %v1573, %v1157
        %v1607 = vsel %vm1600, %v1574, %v1159
        %v1608 = vsel %vm1600, %v1575, %v1161
        %v1609 = vsel %vm1600, %v1576, %v1163
        %v1610 = vsel %vm1600, %v1577, %v1165
        %v1611 = vsel %vm1600, %v1578, %v1167
        %v1612 = vsel %vm1600, %v1579, %v1169
        %v1613 = vsel %vm1600, %v1580, %v1171
        %v1614 = vsel %vm1600, %v1581, %v1173
        %v1615 = vsel %vm1600, %v1582, %v1175
        %v1616 = vsel %vm1600, %v1583, %v1177
        %v1617 = vsel %vm1600, %v1584, %v1179
        %v1618 = vsel %vm1600, %v1585, %v1181
        %v1619 = vsel %vm1600, %v1586, %v1183
        %v1620 = vsel %vm1600, %v1587, %v1185
        %v1621 = vsel %vm1600, %v1588, %v1187
        %v1622 = vsel %vm1600, %v1589, %v1189
        %v1623 = vsel %vm1600, %v1590, %v1191
        %v1624 = vsel %vm1600, %v1591, %v1193
        %v1625 = vsel %vm1600, %v1592, %v1195
        %v1626 = vsel %vm1600, %v1593, %v1197
        %v1627 = vsel %vm1600, %v1594, %v1199
        %v1628 = vsel %vm1600, %v1595, %v1201
        %v1629 = vsel %vm1600, %v1596, %v1203
        %v1630 = vsel %vm1600, %v1597, %v1205
        %v1631 = vsel %vm1600, %v1598, %v1207
        %v1632 = vsel %vm1600, %v1599, %v1209
        %vm1633 = vcmask 228352
        %v1634 = vsel %vm1633, %v1601, %v1243
        %v1635 = vsel %vm1633, %v1602, %v1245
        %v1636 = vsel %vm1633, %v1603, %v1247
        %v1637 = vsel %vm1633, %v1604, %v1249
        %v1638 = vsel %vm1633, %v1605, %v1251
        %v1639 = vsel %vm1633, %v1606, %v1253
        %v1640 = vsel %vm1633, %v1607, %v1255
        %v1641 = vsel %vm1633, %v1608, %v1257
        %v1642 = vsel %vm1633, %v1609, %v1259
        %v1643 = vsel %vm1633, %v1610, %v1261
        %v1644 = vsel %vm1633, %v1611, %v1263
        %v1645 = vsel %vm1633, %v1612, %v1265
        %v1646 = vsel %vm1633, %v1613, %v1267
        %v1647 = vsel %vm1633, %v1614, %v1269
        %v1648 = vsel %vm1633, %v1615, %v1271
        %v1649 = vsel %vm1633, %v1616, %v1273
        %v1650 = vsel %vm1633, %v1617, %v1275
        %v1651 = vsel %vm1633, %v1618, %v1277
        %v1652 = vsel %vm1633, %v1619, %v1279
        %v1653 = vsel %vm1633, %v1620, %v1281
        %v1654 = vsel %vm1633, %v1621, %v1283
        %v1655 = vsel %vm1633, %v1622, %v1285
        %v1656 = vsel %vm1633, %v1623, %v1287
        %v1657 = vsel %vm1633, %v1624, %v1289
        %v1658 = vsel %vm1633, %v1625, %v1291
        %v1659 = vsel %vm1633, %v1626, %v1293
        %v1660 = vsel %vm1633, %v1627, %v1295
        %v1661 = vsel %vm1633, %v1628, %v1297
        %v1662 = vsel %vm1633, %v1629, %v1299
        %v1663 = vsel %vm1633, %v1630, %v1301
        %v1664 = vsel %vm1633, %v1631, %v1303
        %v1665 = vsel %vm1633, %v1632, %v1305
        %vm1666 = vcmask 261120
        %v1667 = vsel %vm1666, %v1634, %v1340
        %v1668 = vsel %vm1666, %v1635, %v1342
        %v1669 = vsel %vm1666, %v1636, %v1344
        %v1670 = vsel %vm1666, %v1637, %v1346
        %v1671 = vsel %vm1666, %v1638, %v1348
        %v1672 = vsel %vm1666, %v1639, %v1350
        %v1673 = vsel %vm1666, %v1640, %v1352
        %v1674 = vsel %vm1666, %v1641, %v1354
        %v1675 = vsel %vm1666, %v1642, %v1356
        %v1676 = vsel %vm1666, %v1643, %v1358
        %v1677 = vsel %vm1666, %v1644, %v1360
        %v1678 = vsel %vm1666, %v1645, %v1362
        %v1679 = vsel %vm1666, %v1646, %v1364
        %v1680 = vsel %vm1666, %v1647, %v1366
        %v1681 = vsel %vm1666, %v1648, %v1368
        %v1682 = vsel %vm1666, %v1649, %v1370
        %v1683 = vsel %vm1666, %v1650, %v1372
        %v1684 = vsel %vm1666, %v1651, %v1374
        %v1685 = vsel %vm1666, %v1652, %v1376
        %v1686 = vsel %vm1666, %v1653, %v1378
        %v1687 = vsel %vm1666, %v1654, %v1380
        %v1688 = vsel %vm1666, %v1655, %v1382
        %v1689 = vsel %vm1666, %v1656, %v1384
        %v1690 = vsel %vm1666, %v1657, %v1386
        %v1691 = vsel %vm1666, %v1658, %v1388
        %v1692 = vsel %vm1666, %v1659, %v1390
        %v1693 = vsel %vm1666, %v1660, %v1392
        %v1694 = vsel %vm1666, %v1661, %v1394
        %v1695 = vsel %vm1666, %v1662, %v1396
        %v1696 = vsel %vm1666, %v1663, %v1398
        %v1697 = vsel %vm1666, %v1664, %v1400
        %v1698 = vsel %vm1666, %v1665, %v1402
        %v1699 = vld [vmem:[%s3] sm:$0xff]
        %vm1700 = vcmask 293888
        %v1702 = vsel %vm1700, %v1699, 0
        %v1705 = vsel %vm1700, %v1667, 0
        %v1708 = vsel %vm1700, %v1668, 0
        %v1711 = vsel %vm1700, %v1669, 0
        %v1714 = vsel %vm1700, %v1670, 0
        %v1717 = vsel %vm1700, %v1671, 0
        %v1720 = vsel %vm1700, %v1672, 0
        %v1723 = vsel %vm1700, %v1673, 0
        %v1726 = vsel %vm1700, %v1674, 0
        %v1729 = vsel %vm1700, %v1675, 0
        %v1732 = vsel %vm1700, %v1676, 0
        %v1735 = vsel %vm1700, %v1677, 0
        %v1738 = vsel %vm1700, %v1678, 0
        %v1741 = vsel %vm1700, %v1679, 0
        %v1744 = vsel %vm1700, %v1680, 0
        %v1747 = vsel %vm1700, %v1681, 0
        %v1750 = vsel %vm1700, %v1682, 0
        %v1753 = vsel %vm1700, %v1683, 0
        %v1756 = vsel %vm1700, %v1684, 0
        %v1759 = vsel %vm1700, %v1685, 0
        %v1762 = vsel %vm1700, %v1686, 0
        %v1765 = vsel %vm1700, %v1687, 0
        %v1768 = vsel %vm1700, %v1688, 0
        %v1771 = vsel %vm1700, %v1689, 0
        %v1774 = vsel %vm1700, %v1690, 0
        %v1777 = vsel %vm1700, %v1691, 0
        %v1780 = vsel %vm1700, %v1692, 0
        %v1783 = vsel %vm1700, %v1693, 0
        %v1786 = vsel %vm1700, %v1694, 0
        %v1789 = vsel %vm1700, %v1695, 0
        %v1792 = vsel %vm1700, %v1696, 0
        %v1795 = vsel %vm1700, %v1697, 0
        %v1798 = vsel %vm1700, %v1698, 0
        %1800 = vmatpush.xpose.msra.mxu0 %v1750
        %1801 = vmatpush.xpose.msra.mxu0 %v1747
        %1802 = vmatpush.xpose.msra.mxu0 %v1744
        %1803 = vmatpush.xpose.msra.mxu0 %v1741
        %1804 = vmatpush.xpose.msra.mxu0 %v1738
        %1805 = vmatpush.xpose.msra.mxu0 %v1735
        %1806 = vmatpush.xpose.msra.mxu0 %v1732
        %1807 = vmatpush.xpose.msra.mxu0 %v1729
        %1808 = vmatpush.xpose.msra.mxu0 %v1726
        %1809 = vmatpush.xpose.msra.mxu0 %v1723
        %1810 = vmatpush.xpose.msra.mxu0 %v1720
        %1811 = vmatpush.xpose.msra.mxu0 %v1717
        %1812 = vmatpush.xpose.msra.mxu0 %v1714
        %1813 = vmatpush.xpose.msra.mxu0 %v1711
        %1814 = vmatpush.xpose.msra.mxu0 %v1708
        %1815 = vmatpush.xpose.msra.mxu0 %v1705
        %1816 = vmatmul.f32.gmra.mxu0 %v1702
        %v1817 = vpop.f32.mrf.mxu0
        %v1818 = vadd.f32 0.0, %v1817
        %1819 = vdwg.mxu0
        %1820 = vmatpush.xpose.msra.mxu0 %v1798
        %1821 = vmatpush.xpose.msra.mxu0 %v1795
        %1822 = vmatpush.xpose.msra.mxu0 %v1792
        %1823 = vmatpush.xpose.msra.mxu0 %v1789
        %1824 = vmatpush.xpose.msra.mxu0 %v1786
        %1825 = vmatpush.xpose.msra.mxu0 %v1783
        %1826 = vmatpush.xpose.msra.mxu0 %v1780
        %1827 = vmatpush.xpose.msra.mxu0 %v1777
        %1828 = vmatpush.xpose.msra.mxu0 %v1774
        %1829 = vmatpush.xpose.msra.mxu0 %v1771
        %1830 = vmatpush.xpose.msra.mxu0 %v1768
        %1831 = vmatpush.xpose.msra.mxu0 %v1765
        %1832 = vmatpush.xpose.msra.mxu0 %v1762
        %1833 = vmatpush.xpose.msra.mxu0 %v1759
        %1834 = vmatpush.xpose.msra.mxu0 %v1756
        %1835 = vmatpush.xpose.msra.mxu0 %v1753
        %1836 = vmatmul.f32.gmra.mxu0 %v1702
        %v1837 = vpop.f32.mrf.mxu0
        %v1838 = vadd.f32 0.0, %v1837
        %1839 = vdwg.mxu0
        %1840 = vst [vmem:[%s307] sm:$0xff] %v1818
        %1841 = vst [vmem:[%s307 + $0x8] sm:$0xff] %v1838
        %s1842 = sand.u32 %s161, 1
        %s1843 = scalar_lea.sflag [#allocation3], %s1842
        %s1844 = sand.u32 %s161, 1
        %s1845 = smul.addr %s1844, 16
        %s1846 = scalar_lea.vmem [#allocation2], %s1845
        // Predicated region
        $region37: #{tpu_custom_call.1} parent=35 // pred_check
          %p1847 = pneg %p171
        $region38: #{tpu_custom_call.1} parent=35 // pred_check_branch
          %1849 = sbr.rel (%p1847) target = $region40
        $region39: #{tpu_custom_call.1} parent=35 // pred_region
          %s1850 = smul.u32 2, %s23
          %1852 = vsyncadd %s1843, 0
          %s1853 = smul.addr %s22, 2
          %s1854 = sadd.s32 %s1850, %s1853
          %s1855 = smul.addr %s1854, 8
          %s1856 = scalar_lea.hbm %s4, %s1855
          %s1858 = sshll.u32 %s1846, 4
          %s1859 = int_to_ptr.vmem [resolvable:$true] %s1858
          %s1860 = sshll.u32 %s1856, 4
          %s1861 = int_to_ptr.hbm [resolvable:$true] %s1860
          %1863 = dma.vmem_to_hbm [thread:$0]  %s1859, 256, %s1861, %s1843
        $region40: #{tpu_custom_call.1} parent=35 // pred_fallthru
          _
      $region36: #{tpu_custom_call.1} parent=5 // pred_fallthru
        _
      %p1864 = scmp.le.s32.totalorder 2, %s13
      // Predicated region
      $region41: #{tpu_custom_call.1} parent=5 // pred_check
        %p1865 = pneg %p1864
      $region42: #{tpu_custom_call.1} parent=5 // pred_check_branch
        %1867 = sbr.rel (%p1865) target = $region44
      $region43: #{tpu_custom_call.1} parent=5 // pred_region
        %s1868 = ssub.s32 %s13, 2
        // Predicated region
        $region45: #{tpu_custom_call.1} parent=43 // pred_check
          %p1869 = pneg %p177
        $region46: #{tpu_custom_call.1} parent=43 // pred_check_branch
          %1871 = sbr.rel (%p1869) target = $region48
        $region47: #{tpu_custom_call.1} parent=43 // pred_region
          %s1872 = sand.u32 %s162, 1
          %s1873 = scalar_lea.sflag [#allocation3], %s1872
          %s1874 = sand.u32 %s162, 1
          %s1875 = smul.addr %s1874, 16
          %s1876 = scalar_lea.vmem [#allocation2], %s1875
          %1878 = dma.done %s1873, 256
        $region48: #{tpu_custom_call.1} parent=43 // pred_fallthru
          _
      $region44: #{tpu_custom_call.1} parent=5 // pred_fallthru
        _
    $region6: #{tpu_custom_call.1} parent=1 // loop_footer
      %s17 = sadd.s32 1, %s13
    $region7: #{tpu_custom_call.1} parent=1 // loop_footer_branch
      %12 = sbr.rel target = $region3
    $region8: #{tpu_custom_call.1} parent=1 // loop_exit
      _
    %1879 = vsyncpa [#allocation3], 1
    %s1880 = scalar_lea.sflag [#allocation3], 1
    %1881 = vsyncpa %s1880, 1

</llo_original>
